<compile_context>
chip_gen: v7x
topology: tpu7x:2x2x1
jax: 0.10.0
libtpu: 0.0.40
codegen_flags: <defaults>
</compile_context>

<pallas_src>
import jax
import jax.numpy as jnp
from jax.experimental import pallas as pl
from jax.experimental.pallas import tpu as pltpu

# ----------------------------- config ---------------------------------------
B = 2
C_IN = 4
H = W = 16
NUM_FEATURES = 32        # encoder.num_features
META_IN = 4              # args.use_metadata_num
META_DIM = 16            # args.metadata_dim
NUM_CLASSES = 5
AUX_OUT = 6              # args.aux_loss_feature_outnum[0]
EPS = 1e-5               # LayerNorm / BatchNorm eps (torch defaults)

_VMEM_SPEC = pl.BlockSpec(memory_space=pltpu.MemorySpace.VMEM)

# packed bias-slab row indices
_V_CONV_B, _V_LN_G, _V_LN_B, _V_MD_B1, _V_MD_B2, _V_GATE_B, _V_HEAD_B = range(7)


# ------------------------- fused model kernel --------------------------------
def _fused_kernel(xp_ref, meta_ref, cw_ref, w1_ref, w2_ref, gw_ref, hw_ref,
                  vec_ref, main_ref, aux_ref):
    """Whole forward pass in one kernel.

    xp   : (B, Cin, H+2, W+2)  zero-padded NCHW input
    cw   : (9, Cin, Cout)      conv weight, k = dy*3 + dx
    w1   : (META_IN, META_DIM) metadata Linear1 (BN1 folded in)
    w2   : (META_DIM, Cout)    metadata Linear2 (BN2 folded in)
    gw   : (2, Cout, Cout)     gate weight split: [0] * image, [1] * metadata
    hw   : (Cout, 5 + 6)       main + aux head weights concatenated
    vec  : (7, Cout)           packed bias/scale slab (see _V_* indices)
    """
    b = meta_ref.shape[0]

    # ---- stand-in backbone (3x3 same-pad conv) fused with GAP ----------------
    # GAP(conv(x))[b, co] = (1/HW) * sum_k windowsum_k[b, :] @ W_k + bias
    xp = xp_ref[...]                                              # one VMEM load
    cw = cw_ref[...]
    acc = jnp.zeros((b, NUM_FEATURES), jnp.float32)
    for dy in range(3):
        # collapse the H-window rows once per dy: (B, Cin, W+2)
        col = jnp.sum(xp[:, :, dy:dy + H, :], axis=2)
        for dx in range(3):
            s = jnp.sum(col[:, :, dx:dx + W], axis=2)             # (B, Cin)
            acc = acc + jnp.dot(s, cw[dy * 3 + dx],
                                preferred_element_type=jnp.float32)
    img = acc * (1.0 / float(H * W)) + vec_ref[_V_CONV_B:_V_CONV_B + 1, :]

    # ---- LayerNorm2d on the pooled features (normalizes over channels) ------
    mu = jnp.mean(img, axis=-1, keepdims=True)
    var = jnp.mean((img - mu) * (img - mu), axis=-1, keepdims=True)
    img = ((img - mu) * jax.lax.rsqrt(var + EPS)
           * vec_ref[_V_LN_G:_V_LN_G + 1, :] + vec_ref[_V_LN_B:_V_LN_B + 1, :])

    # ---- metadata encoder: (Linear⊕BN) -> SiLU -> (Linear⊕BN) -> SiLU --------
    m = jnp.dot(meta_ref[...], w1_ref[...], preferred_element_type=jnp.float32)
    m = m + vec_ref[_V_MD_B1:_V_MD_B1 + 1, 0:META_DIM]
    m = m * jax.nn.sigmoid(m)                                     # SiLU
    m = jnp.dot(m, w2_ref[...], preferred_element_type=jnp.float32)
    m = m + vec_ref[_V_MD_B2:_V_MD_B2 + 1, :]
    m = m * jax.nn.sigmoid(m)                                     # SiLU  (B, C)

    # ---- gated fusion: sigmoid(Linear(concat)) done as two matmuls ----------
    gate = jax.nn.sigmoid(
        jnp.dot(img, gw_ref[0], preferred_element_type=jnp.float32)
        + jnp.dot(m, gw_ref[1], preferred_element_type=jnp.float32)
        + vec_ref[_V_GATE_B:_V_GATE_B + 1, :])
    fused = img * gate                                            # (B, C)

    # ---- heads (5x dropout-averaged == single linear in inference) ----------
    out = jnp.dot(fused, hw_ref[...], preferred_element_type=jnp.float32)
    out = out + vec_ref[_V_HEAD_B:_V_HEAD_B + 1, 0:NUM_CLASSES + AUX_OUT]
    main_ref[...] = out[:, 0:NUM_CLASSES]
    aux_ref[...] = out[:, NUM_CLASSES:NUM_CLASSES + AUX_OUT]


@jax.jit
def model_forward(images, metadata, params):
    """images: (B, Cin, H, W) NCHW; metadata: (B, META_IN)."""
    b = images.shape[0]
    xp = jnp.pad(images, ((0, 0), (0, 0), (1, 1), (1, 1)))        # only XLA prep op
    inputs = (xp, metadata,
              params["conv_w"], params["md_w1"], params["md_w2"],
              params["gate_w"], params["head_w"], params["vec"])
    return pl.pallas_call(
        _fused_kernel,
        out_shape=(
            jax.ShapeDtypeStruct((b, NUM_CLASSES), jnp.float32),
            jax.ShapeDtypeStruct((b, AUX_OUT), jnp.float32),
        ),
        in_specs=[_VMEM_SPEC] * len(inputs),
        out_specs=(_VMEM_SPEC, _VMEM_SPEC),
    )(*inputs)


# ----------------------------- parameters ------------------------------------
def init_params(key):
    """Raw, PyTorch-like parameters for the synthetic model."""
    ks = jax.random.split(key, 8)
    s = 0.05
    return {
        # stand-in backbone conv
        "conv_w": jax.random.normal(ks[0], (NUM_FEATURES, C_IN, 3, 3), jnp.float32) * s,
        "conv_b": jnp.zeros((NUM_FEATURES,), jnp.float32),
        # LayerNorm2d([C,1,1])
        "ln_g": jnp.ones((NUM_FEATURES,), jnp.float32),
        "ln_b": jnp.zeros((NUM_FEATURES,), jnp.float32),
        # metadata encoder (metadata_head_type='linear')
        "md_w1": jax.random.normal(ks[1], (META_IN, META_DIM), jnp.float32) * s,
        "md_b1": jnp.zeros((META_DIM,), jnp.float32),
        "bn1_g": jnp.ones((META_DIM,), jnp.float32),
        "bn1_b": jnp.zeros((META_DIM,), jnp.float32),
        "bn1_rm": jnp.zeros((META_DIM,), jnp.float32),
        "bn1_rv": jnp.ones((META_DIM,), jnp.float32),
        "md_w2": jax.random.normal(ks[2], (META_DIM, NUM_FEATURES), jnp.float32) * s,
        "md_b2": jnp.zeros((NUM_FEATURES,), jnp.float32),
        "bn2_g": jnp.ones((NUM_FEATURES,), jnp.float32),
        "bn2_b": jnp.zeros((NUM_FEATURES,), jnp.float32),
        "bn2_rm": jnp.zeros((NUM_FEATURES,), jnp.float32),
        "bn2_rv": jnp.ones((NUM_FEATURES,), jnp.float32),
        # gated fusion (Linear(2C -> C) + Sigmoid), stored (in, out)
        "gate_w": jax.random.normal(ks[3], (2 * NUM_FEATURES, NUM_FEATURES), jnp.float32) * s,
        "gate_b": jnp.zeros((NUM_FEATURES,), jnp.float32),
        # classification heads, stored (in, out)
        "main_w": jax.random.normal(ks[4], (NUM_FEATURES, NUM_CLASSES), jnp.float32) * s,
        "main_b": jnp.zeros((NUM_CLASSES,), jnp.float32),
        "aux_w": jax.random.normal(ks[5], (NUM_FEATURES, AUX_OUT), jnp.float32) * s,
        "aux_b": jnp.zeros((AUX_OUT,), jnp.float32),
    }


def pack_params(p):
    """One-time transform: fold inference BatchNorm1d into the Linears, reorder
    the conv weight for in-kernel use, and pack all bias vectors into one slab."""
    # BN fold: (x - rm) * g / sqrt(rv + eps) + b  ==  x * s + t
    s1 = p["bn1_g"] * jax.lax.rsqrt(p["bn1_rv"] + EPS)
    w1 = p["md_w1"] * s1[None, :]
    b1 = p["md_b1"] * s1 + (p["bn1_b"] - p["bn1_rm"] * s1)
    s2 = p["bn2_g"] * jax.lax.rsqrt(p["bn2_rv"] + EPS)
    w2 = p["md_w2"] * s2[None, :]
    b2 = p["md_b2"] * s2 + (p["bn2_b"] - p["bn2_rm"] * s2)

    # conv weight -> (9, Cin, Cout), k = dy*3 + dx
    conv_w = p["conv_w"].transpose(2, 3, 1, 0).reshape(9, C_IN, NUM_FEATURES)
    # gate weight -> (2, C, C): [0] multiplies image features, [1] metadata
    gate_w = p["gate_w"].reshape(2, NUM_FEATURES, NUM_FEATURES)
    # main + aux head weights in one matrix
    head_w = jnp.concatenate([p["main_w"], p["aux_w"]], axis=1)        # (C, 11)
    head_b = jnp.concatenate([p["main_b"], p["aux_b"]], axis=0)        # (11,)

    vec = jnp.zeros((7, NUM_FEATURES), jnp.float32)
    vec = vec.at[_V_CONV_B, :].set(p["conv_b"])
    vec = vec.at[_V_LN_G, :].set(p["ln_g"])
    vec = vec.at[_V_LN_B, :].set(p["ln_b"])
    vec = vec.at[_V_MD_B1, :META_DIM].set(b1)
    vec = vec.at[_V_MD_B2, :].set(b2)
    vec = vec.at[_V_GATE_B, :].set(p["gate_b"])
    vec = vec.at[_V_HEAD_B, :NUM_CLASSES + AUX_OUT].set(head_b)

    return {"conv_w": conv_w, "md_w1": w1, "md_w2": w2,
            "gate_w": gate_w, "head_w": head_w, "vec": vec}


# ----------------------------- main ------------------------------------------
if __name__ == "__main__":
    key = jax.random.PRNGKey(0)
    k_img, k_meta, k_par = jax.random.split(key, 3)
    images = jax.random.normal(k_img, (B, C_IN, H, W), jnp.float32)     # NCHW
    metadata = jax.random.normal(k_meta, (B, META_IN), jnp.float32)
    params = pack_params(init_params(k_par))

    main_out, aux_out = model_forward(images, metadata, params)
    jax.block_until_ready((main_out, aux_out))
    assert main_out.shape == (B, NUM_CLASSES)
    assert aux_out.shape == (B, AUX_OUT)
    print("KERNEL_OK")
</pallas_src>

<mosaic_0001>
module attributes {stable_mosaic.version = 11 : i64} {
  func.func @_fused_kernel(%arg0: memref<2x4x18x18xf32, #tpu.memory_space<vmem>>, %arg1: memref<2x4xf32, #tpu.memory_space<vmem>>, %arg2: memref<9x4x32xf32, #tpu.memory_space<vmem>>, %arg3: memref<4x16xf32, #tpu.memory_space<vmem>>, %arg4: memref<16x32xf32, #tpu.memory_space<vmem>>, %arg5: memref<2x32x32xf32, #tpu.memory_space<vmem>>, %arg6: memref<32x11xf32, #tpu.memory_space<vmem>>, %arg7: memref<7x32xf32, #tpu.memory_space<vmem>>, %arg8: memref<2x5xf32, #tpu.memory_space<vmem>>, %arg9: memref<2x6xf32, #tpu.memory_space<vmem>>) attributes {dimension_semantics = [], scalar_prefetch = 0 : i64, scratch_operands = 0 : i64, tpu.core_type = #tpu.core_type<tc>} {
    %c0 = arith.constant 0 : index
    %c0_0 = arith.constant 0 : index
    %c0_1 = arith.constant 0 : index
    %c0_2 = arith.constant 0 : index
    %0 = vector.load %arg0[%c0, %c0_0, %c0_1, %c0_2] : memref<2x4x18x18xf32, #tpu.memory_space<vmem>>, vector<2x4x18x18xf32>
    %c0_3 = arith.constant 0 : index
    %c0_4 = arith.constant 0 : index
    %c0_5 = arith.constant 0 : index
    %1 = vector.load %arg2[%c0_3, %c0_4, %c0_5] : memref<9x4x32xf32, #tpu.memory_space<vmem>>, vector<9x4x32xf32>
    %cst = arith.constant 0.000000e+00 : f32
    %2 = vector.broadcast %cst : f32 to vector<2x32xf32>
    %3 = vector.extract_strided_slice %0 {offsets = [0, 0, 0, 0], sizes = [2, 4, 16, 18], strides = [1, 1, 1, 1]} : vector<2x4x18x18xf32> to vector<2x4x16x18xf32>
    %cst_6 = arith.constant dense<0.000000e+00> : vector<2x4x18xf32>
    %4 = vector.multi_reduction <add>, %3, %cst_6 [2] : vector<2x4x16x18xf32> to vector<2x4x18xf32>
    %5 = vector.extract_strided_slice %4 {offsets = [0, 0, 0], sizes = [2, 4, 16], strides = [1, 1, 1]} : vector<2x4x18xf32> to vector<2x4x16xf32>
    %cst_7 = arith.constant dense<0.000000e+00> : vector<2x4xf32>
    %6 = vector.multi_reduction <add>, %5, %cst_7 [2] : vector<2x4x16xf32> to vector<2x4xf32>
    %7 = vector.extract_strided_slice %1 {offsets = [0, 0, 0], sizes = [1, 4, 32], strides = [1, 1, 1]} : vector<9x4x32xf32> to vector<1x4x32xf32>
    %8 = vector.shape_cast %7 : vector<1x4x32xf32> to vector<4x32xf32>
    %cst_8 = arith.constant dense<0.000000e+00> : vector<2x32xf32>
    %9 = tpu.matmul %6, %8, %cst_8 {dimension_numbers = #tpu.dot_dimension_numbers<[1], [0], [0], [1], [0, 0, 1, 1], [], []>} : vector<2x4xf32>, vector<4x32xf32>, vector<2x32xf32> -> vector<2x32xf32>
    %10 = arith.addf %2, %9 : vector<2x32xf32>
    %11 = vector.extract_strided_slice %4 {offsets = [0, 0, 1], sizes = [2, 4, 16], strides = [1, 1, 1]} : vector<2x4x18xf32> to vector<2x4x16xf32>
    %cst_9 = arith.constant dense<0.000000e+00> : vector<2x4xf32>
    %12 = vector.multi_reduction <add>, %11, %cst_9 [2] : vector<2x4x16xf32> to vector<2x4xf32>
    %13 = vector.extract_strided_slice %1 {offsets = [1, 0, 0], sizes = [1, 4, 32], strides = [1, 1, 1]} : vector<9x4x32xf32> to vector<1x4x32xf32>
    %14 = vector.shape_cast %13 : vector<1x4x32xf32> to vector<4x32xf32>
    %cst_10 = arith.constant dense<0.000000e+00> : vector<2x32xf32>
    %15 = tpu.matmul %12, %14, %cst_10 {dimension_numbers = #tpu.dot_dimension_numbers<[1], [0], [0], [1], [0, 0, 1, 1], [], []>} : vector<2x4xf32>, vector<4x32xf32>, vector<2x32xf32> -> vector<2x32xf32>
    %16 = arith.addf %10, %15 : vector<2x32xf32>
    %17 = vector.extract_strided_slice %4 {offsets = [0, 0, 2], sizes = [2, 4, 16], strides = [1, 1, 1]} : vector<2x4x18xf32> to vector<2x4x16xf32>
    %cst_11 = arith.constant dense<0.000000e+00> : vector<2x4xf32>
    %18 = vector.multi_reduction <add>, %17, %cst_11 [2] : vector<2x4x16xf32> to vector<2x4xf32>
    %19 = vector.extract_strided_slice %1 {offsets = [2, 0, 0], sizes = [1, 4, 32], strides = [1, 1, 1]} : vector<9x4x32xf32> to vector<1x4x32xf32>
    %20 = vector.shape_cast %19 : vector<1x4x32xf32> to vector<4x32xf32>
    %cst_12 = arith.constant dense<0.000000e+00> : vector<2x32xf32>
    %21 = tpu.matmul %18, %20, %cst_12 {dimension_numbers = #tpu.dot_dimension_numbers<[1], [0], [0], [1], [0, 0, 1, 1], [], []>} : vector<2x4xf32>, vector<4x32xf32>, vector<2x32xf32> -> vector<2x32xf32>
    %22 = arith.addf %16, %21 : vector<2x32xf32>
    %23 = vector.extract_strided_slice %0 {offsets = [0, 0, 1, 0], sizes = [2, 4, 16, 18], strides = [1, 1, 1, 1]} : vector<2x4x18x18xf32> to vector<2x4x16x18xf32>
    %cst_13 = arith.constant dense<0.000000e+00> : vector<2x4x18xf32>
    %24 = vector.multi_reduction <add>, %23, %cst_13 [2] : vector<2x4x16x18xf32> to vector<2x4x18xf32>
    %25 = vector.extract_strided_slice %24 {offsets = [0, 0, 0], sizes = [2, 4, 16], strides = [1, 1, 1]} : vector<2x4x18xf32> to vector<2x4x16xf32>
    %cst_14 = arith.constant dense<0.000000e+00> : vector<2x4xf32>
    %26 = vector.multi_reduction <add>, %25, %cst_14 [2] : vector<2x4x16xf32> to vector<2x4xf32>
    %27 = vector.extract_strided_slice %1 {offsets = [3, 0, 0], sizes = [1, 4, 32], strides = [1, 1, 1]} : vector<9x4x32xf32> to vector<1x4x32xf32>
    %28 = vector.shape_cast %27 : vector<1x4x32xf32> to vector<4x32xf32>
    %cst_15 = arith.constant dense<0.000000e+00> : vector<2x32xf32>
    %29 = tpu.matmul %26, %28, %cst_15 {dimension_numbers = #tpu.dot_dimension_numbers<[1], [0], [0], [1], [0, 0, 1, 1], [], []>} : vector<2x4xf32>, vector<4x32xf32>, vector<2x32xf32> -> vector<2x32xf32>
    %30 = arith.addf %22, %29 : vector<2x32xf32>
    %31 = vector.extract_strided_slice %24 {offsets = [0, 0, 1], sizes = [2, 4, 16], strides = [1, 1, 1]} : vector<2x4x18xf32> to vector<2x4x16xf32>
    %cst_16 = arith.constant dense<0.000000e+00> : vector<2x4xf32>
    %32 = vector.multi_reduction <add>, %31, %cst_16 [2] : vector<2x4x16xf32> to vector<2x4xf32>
    %33 = vector.extract_strided_slice %1 {offsets = [4, 0, 0], sizes = [1, 4, 32], strides = [1, 1, 1]} : vector<9x4x32xf32> to vector<1x4x32xf32>
    %34 = vector.shape_cast %33 : vector<1x4x32xf32> to vector<4x32xf32>
    %cst_17 = arith.constant dense<0.000000e+00> : vector<2x32xf32>
    %35 = tpu.matmul %32, %34, %cst_17 {dimension_numbers = #tpu.dot_dimension_numbers<[1], [0], [0], [1], [0, 0, 1, 1], [], []>} : vector<2x4xf32>, vector<4x32xf32>, vector<2x32xf32> -> vector<2x32xf32>
    %36 = arith.addf %30, %35 : vector<2x32xf32>
    %37 = vector.extract_strided_slice %24 {offsets = [0, 0, 2], sizes = [2, 4, 16], strides = [1, 1, 1]} : vector<2x4x18xf32> to vector<2x4x16xf32>
    %cst_18 = arith.constant dense<0.000000e+00> : vector<2x4xf32>
    %38 = vector.multi_reduction <add>, %37, %cst_18 [2] : vector<2x4x16xf32> to vector<2x4xf32>
    %39 = vector.extract_strided_slice %1 {offsets = [5, 0, 0], sizes = [1, 4, 32], strides = [1, 1, 1]} : vector<9x4x32xf32> to vector<1x4x32xf32>
    %40 = vector.shape_cast %39 : vector<1x4x32xf32> to vector<4x32xf32>
    %cst_19 = arith.constant dense<0.000000e+00> : vector<2x32xf32>
    %41 = tpu.matmul %38, %40, %cst_19 {dimension_numbers = #tpu.dot_dimension_numbers<[1], [0], [0], [1], [0, 0, 1, 1], [], []>} : vector<2x4xf32>, vector<4x32xf32>, vector<2x32xf32> -> vector<2x32xf32>
    %42 = arith.addf %36, %41 : vector<2x32xf32>
    %43 = vector.extract_strided_slice %0 {offsets = [0, 0, 2, 0], sizes = [2, 4, 16, 18], strides = [1, 1, 1, 1]} : vector<2x4x18x18xf32> to vector<2x4x16x18xf32>
    %cst_20 = arith.constant dense<0.000000e+00> : vector<2x4x18xf32>
    %44 = vector.multi_reduction <add>, %43, %cst_20 [2] : vector<2x4x16x18xf32> to vector<2x4x18xf32>
    %45 = vector.extract_strided_slice %44 {offsets = [0, 0, 0], sizes = [2, 4, 16], strides = [1, 1, 1]} : vector<2x4x18xf32> to vector<2x4x16xf32>
    %cst_21 = arith.constant dense<0.000000e+00> : vector<2x4xf32>
    %46 = vector.multi_reduction <add>, %45, %cst_21 [2] : vector<2x4x16xf32> to vector<2x4xf32>
    %47 = vector.extract_strided_slice %1 {offsets = [6, 0, 0], sizes = [1, 4, 32], strides = [1, 1, 1]} : vector<9x4x32xf32> to vector<1x4x32xf32>
    %48 = vector.shape_cast %47 : vector<1x4x32xf32> to vector<4x32xf32>
    %cst_22 = arith.constant dense<0.000000e+00> : vector<2x32xf32>
    %49 = tpu.matmul %46, %48, %cst_22 {dimension_numbers = #tpu.dot_dimension_numbers<[1], [0], [0], [1], [0, 0, 1, 1], [], []>} : vector<2x4xf32>, vector<4x32xf32>, vector<2x32xf32> -> vector<2x32xf32>
    %50 = arith.addf %42, %49 : vector<2x32xf32>
    %51 = vector.extract_strided_slice %44 {offsets = [0, 0, 1], sizes = [2, 4, 16], strides = [1, 1, 1]} : vector<2x4x18xf32> to vector<2x4x16xf32>
    %cst_23 = arith.constant dense<0.000000e+00> : vector<2x4xf32>
    %52 = vector.multi_reduction <add>, %51, %cst_23 [2] : vector<2x4x16xf32> to vector<2x4xf32>
    %53 = vector.extract_strided_slice %1 {offsets = [7, 0, 0], sizes = [1, 4, 32], strides = [1, 1, 1]} : vector<9x4x32xf32> to vector<1x4x32xf32>
    %54 = vector.shape_cast %53 : vector<1x4x32xf32> to vector<4x32xf32>
    %cst_24 = arith.constant dense<0.000000e+00> : vector<2x32xf32>
    %55 = tpu.matmul %52, %54, %cst_24 {dimension_numbers = #tpu.dot_dimension_numbers<[1], [0], [0], [1], [0, 0, 1, 1], [], []>} : vector<2x4xf32>, vector<4x32xf32>, vector<2x32xf32> -> vector<2x32xf32>
    %56 = arith.addf %50, %55 : vector<2x32xf32>
    %57 = vector.extract_strided_slice %44 {offsets = [0, 0, 2], sizes = [2, 4, 16], strides = [1, 1, 1]} : vector<2x4x18xf32> to vector<2x4x16xf32>
    %cst_25 = arith.constant dense<0.000000e+00> : vector<2x4xf32>
    %58 = vector.multi_reduction <add>, %57, %cst_25 [2] : vector<2x4x16xf32> to vector<2x4xf32>
    %59 = vector.extract_strided_slice %1 {offsets = [8, 0, 0], sizes = [1, 4, 32], strides = [1, 1, 1]} : vector<9x4x32xf32> to vector<1x4x32xf32>
    %60 = vector.shape_cast %59 : vector<1x4x32xf32> to vector<4x32xf32>
    %cst_26 = arith.constant dense<0.000000e+00> : vector<2x32xf32>
    %61 = tpu.matmul %58, %60, %cst_26 {dimension_numbers = #tpu.dot_dimension_numbers<[1], [0], [0], [1], [0, 0, 1, 1], [], []>} : vector<2x4xf32>, vector<4x32xf32>, vector<2x32xf32> -> vector<2x32xf32>
    %62 = arith.addf %56, %61 : vector<2x32xf32>
    %cst_27 = arith.constant 3.906250e-03 : f32
    %63 = vector.broadcast %cst_27 : f32 to vector<2x32xf32>
    %64 = arith.mulf %62, %63 : vector<2x32xf32>
    %c0_28 = arith.constant 0 : index
    %c0_29 = arith.constant 0 : index
    %65 = vector.load %arg7[%c0_28, %c0_29] : memref<7x32xf32, #tpu.memory_space<vmem>>, vector<1x32xf32>
    %66 = vector.broadcast %65 : vector<1x32xf32> to vector<2x32xf32>
    %67 = arith.addf %64, %66 : vector<2x32xf32>
    %cst_30 = arith.constant dense<0.000000e+00> : vector<2xf32>
    %68 = vector.multi_reduction <add>, %67, %cst_30 [1] : vector<2x32xf32> to vector<2xf32>
    %69 = vector.shape_cast %68 : vector<2xf32> to vector<2x1xf32>
    %cst_31 = arith.constant 3.200000e+01 : f32
    %70 = vector.broadcast %cst_31 : f32 to vector<2x1xf32>
    %71 = arith.divf %69, %70 : vector<2x1xf32>
    %72 = vector.broadcast %71 : vector<2x1xf32> to vector<2x32xf32>
    %73 = arith.subf %67, %72 : vector<2x32xf32>
    %74 = vector.broadcast %71 : vector<2x1xf32> to vector<2x32xf32>
    %75 = arith.subf %67, %74 : vector<2x32xf32>
    %76 = arith.mulf %73, %75 : vector<2x32xf32>
    %cst_32 = arith.constant dense<0.000000e+00> : vector<2xf32>
    %77 = vector.multi_reduction <add>, %76, %cst_32 [1] : vector<2x32xf32> to vector<2xf32>
    %78 = vector.shape_cast %77 : vector<2xf32> to vector<2x1xf32>
    %cst_33 = arith.constant 3.200000e+01 : f32
    %79 = vector.broadcast %cst_33 : f32 to vector<2x1xf32>
    %80 = arith.divf %78, %79 : vector<2x1xf32>
    %81 = vector.broadcast %71 : vector<2x1xf32> to vector<2x32xf32>
    %82 = arith.subf %67, %81 : vector<2x32xf32>
    %cst_34 = arith.constant 9.99999974E-6 : f32
    %83 = vector.broadcast %cst_34 : f32 to vector<2x1xf32>
    %84 = arith.addf %80, %83 : vector<2x1xf32>
    %85 = math.rsqrt %84 : vector<2x1xf32>
    %86 = vector.broadcast %85 : vector<2x1xf32> to vector<2x32xf32>
    %87 = arith.mulf %82, %86 : vector<2x32xf32>
    %c1 = arith.constant 1 : index
    %c0_35 = arith.constant 0 : index
    %88 = vector.load %arg7[%c1, %c0_35] : memref<7x32xf32, #tpu.memory_space<vmem>>, vector<1x32xf32>
    %89 = vector.broadcast %88 : vector<1x32xf32> to vector<2x32xf32>
    %90 = arith.mulf %87, %89 : vector<2x32xf32>
    %c2 = arith.constant 2 : index
    %c0_36 = arith.constant 0 : index
    %91 = vector.load %arg7[%c2, %c0_36] : memref<7x32xf32, #tpu.memory_space<vmem>>, vector<1x32xf32>
    %92 = vector.broadcast %91 : vector<1x32xf32> to vector<2x32xf32>
    %93 = arith.addf %90, %92 : vector<2x32xf32>
    %c0_37 = arith.constant 0 : index
    %c0_38 = arith.constant 0 : index
    %94 = vector.load %arg1[%c0_37, %c0_38] : memref<2x4xf32, #tpu.memory_space<vmem>>, vector<2x4xf32>
    %c0_39 = arith.constant 0 : index
    %c0_40 = arith.constant 0 : index
    %95 = vector.load %arg3[%c0_39, %c0_40] : memref<4x16xf32, #tpu.memory_space<vmem>>, vector<4x16xf32>
    %cst_41 = arith.constant dense<0.000000e+00> : vector<2x16xf32>
    %96 = tpu.matmul %94, %95, %cst_41 {dimension_numbers = #tpu.dot_dimension_numbers<[1], [0], [0], [1], [0, 0, 1, 1], [], []>} : vector<2x4xf32>, vector<4x16xf32>, vector<2x16xf32> -> vector<2x16xf32>
    %c3 = arith.constant 3 : index
    %c0_42 = arith.constant 0 : index
    %97 = vector.load %arg7[%c3, %c0_42] : memref<7x32xf32, #tpu.memory_space<vmem>>, vector<1x16xf32>
    %98 = vector.broadcast %97 : vector<1x16xf32> to vector<2x16xf32>
    %99 = arith.addf %96, %98 : vector<2x16xf32>
    %100 = arith.negf %99 : vector<2x16xf32>
    %101 = math.exp %100 : vector<2x16xf32>
    %cst_43 = arith.constant 1.000000e+00 : f32
    %102 = vector.broadcast %cst_43 : f32 to vector<2x16xf32>
    %103 = arith.addf %102, %101 : vector<2x16xf32>
    %104 = arith.divf %102, %103 : vector<2x16xf32>
    %105 = arith.mulf %99, %104 : vector<2x16xf32>
    %c0_44 = arith.constant 0 : index
    %c0_45 = arith.constant 0 : index
    %106 = vector.load %arg4[%c0_44, %c0_45] : memref<16x32xf32, #tpu.memory_space<vmem>>, vector<16x32xf32>
    %cst_46 = arith.constant dense<0.000000e+00> : vector<2x32xf32>
    %107 = tpu.matmul %105, %106, %cst_46 {dimension_numbers = #tpu.dot_dimension_numbers<[1], [0], [0], [1], [0, 0, 1, 1], [], []>} : vector<2x16xf32>, vector<16x32xf32>, vector<2x32xf32> -> vector<2x32xf32>
    %c4 = arith.constant 4 : index
    %c0_47 = arith.constant 0 : index
    %108 = vector.load %arg7[%c4, %c0_47] : memref<7x32xf32, #tpu.memory_space<vmem>>, vector<1x32xf32>
    %109 = vector.broadcast %108 : vector<1x32xf32> to vector<2x32xf32>
    %110 = arith.addf %107, %109 : vector<2x32xf32>
    %111 = arith.negf %110 : vector<2x32xf32>
    %112 = math.exp %111 : vector<2x32xf32>
    %cst_48 = arith.constant 1.000000e+00 : f32
    %113 = vector.broadcast %cst_48 : f32 to vector<2x32xf32>
    %114 = arith.addf %113, %112 : vector<2x32xf32>
    %115 = arith.divf %113, %114 : vector<2x32xf32>
    %116 = arith.mulf %110, %115 : vector<2x32xf32>
    %c0_49 = arith.constant 0 : index
    %c0_50 = arith.constant 0 : index
    %c0_51 = arith.constant 0 : index
    %117 = vector.load %arg5[%c0_49, %c0_50, %c0_51] : memref<2x32x32xf32, #tpu.memory_space<vmem>>, vector<1x32x32xf32>
    %118 = vector.shape_cast %117 : vector<1x32x32xf32> to vector<32x32xf32>
    %cst_52 = arith.constant dense<0.000000e+00> : vector<2x32xf32>
    %119 = tpu.matmul %93, %118, %cst_52 {dimension_numbers = #tpu.dot_dimension_numbers<[1], [0], [0], [1], [0, 0, 1, 1], [], []>} : vector<2x32xf32>, vector<32x32xf32>, vector<2x32xf32> -> vector<2x32xf32>
    %c1_53 = arith.constant 1 : index
    %c0_54 = arith.constant 0 : index
    %c0_55 = arith.constant 0 : index
    %120 = vector.load %arg5[%c1_53, %c0_54, %c0_55] : memref<2x32x32xf32, #tpu.memory_space<vmem>>, vector<1x32x32xf32>
    %121 = vector.shape_cast %120 : vector<1x32x32xf32> to vector<32x32xf32>
    %cst_56 = arith.constant dense<0.000000e+00> : vector<2x32xf32>
    %122 = tpu.matmul %116, %121, %cst_56 {dimension_numbers = #tpu.dot_dimension_numbers<[1], [0], [0], [1], [0, 0, 1, 1], [], []>} : vector<2x32xf32>, vector<32x32xf32>, vector<2x32xf32> -> vector<2x32xf32>
    %123 = arith.addf %119, %122 : vector<2x32xf32>
    %c5 = arith.constant 5 : index
    %c0_57 = arith.constant 0 : index
    %124 = vector.load %arg7[%c5, %c0_57] : memref<7x32xf32, #tpu.memory_space<vmem>>, vector<1x32xf32>
    %125 = vector.broadcast %124 : vector<1x32xf32> to vector<2x32xf32>
    %126 = arith.addf %123, %125 : vector<2x32xf32>
    %127 = arith.negf %126 : vector<2x32xf32>
    %128 = math.exp %127 : vector<2x32xf32>
    %cst_58 = arith.constant 1.000000e+00 : f32
    %129 = vector.broadcast %cst_58 : f32 to vector<2x32xf32>
    %130 = arith.addf %129, %128 : vector<2x32xf32>
    %131 = arith.divf %129, %130 : vector<2x32xf32>
    %132 = arith.mulf %93, %131 : vector<2x32xf32>
    %c0_59 = arith.constant 0 : index
    %c0_60 = arith.constant 0 : index
    %133 = vector.load %arg6[%c0_59, %c0_60] : memref<32x11xf32, #tpu.memory_space<vmem>>, vector<32x11xf32>
    %cst_61 = arith.constant dense<0.000000e+00> : vector<2x11xf32>
    %134 = tpu.matmul %132, %133, %cst_61 {dimension_numbers = #tpu.dot_dimension_numbers<[1], [0], [0], [1], [0, 0, 1, 1], [], []>} : vector<2x32xf32>, vector<32x11xf32>, vector<2x11xf32> -> vector<2x11xf32>
    %c6 = arith.constant 6 : index
    %c0_62 = arith.constant 0 : index
    %135 = vector.load %arg7[%c6, %c0_62] : memref<7x32xf32, #tpu.memory_space<vmem>>, vector<1x11xf32>
    %136 = vector.broadcast %135 : vector<1x11xf32> to vector<2x11xf32>
    %137 = arith.addf %134, %136 : vector<2x11xf32>
    %138 = vector.extract_strided_slice %137 {offsets = [0, 0], sizes = [2, 5], strides = [1, 1]} : vector<2x11xf32> to vector<2x5xf32>
    %c0_63 = arith.constant 0 : index
    %c0_64 = arith.constant 0 : index
    %139 = vector.load %arg8[%c0_63, %c0_64] : memref<2x5xf32, #tpu.memory_space<vmem>>, vector<2x5xf32>
    tpu.vector_store %arg8[%c0_63, %c0_64], %138 {strides = array<i32>} : memref<2x5xf32, #tpu.memory_space<vmem>>, vector<2x5xf32>,
    %140 = vector.extract_strided_slice %137 {offsets = [0, 5], sizes = [2, 6], strides = [1, 1]} : vector<2x11xf32> to vector<2x6xf32>
    %c0_65 = arith.constant 0 : index
    %c0_66 = arith.constant 0 : index
    %141 = vector.load %arg9[%c0_65, %c0_66] : memref<2x6xf32, #tpu.memory_space<vmem>>, vector<2x6xf32>
    tpu.vector_store %arg9[%c0_65, %c0_66], %140 {strides = array<i32>} : memref<2x6xf32, #tpu.memory_space<vmem>>, vector<2x6xf32>,
    return
  }
}

</mosaic_0001>

<llo_original>
// kernel: model_forward.1
$region0: #{model_forward.1}
  #allocation0 [shape = 'u32[]', space=smem, size = 0x4, offset = 0x4, fixed_abs, tag = 'smem constant byte address 0x4 - core index']
  #allocation1 [shape = 'u32[144,128]{1,0:T(1,128)}', space=vmem, size = 0x12000, scoped, tag = 'internal scratch']
  %s0 = inlined_call_operand.vmem [shape: f32[2,4,18,18], index: 0, kind: input, shape index: {}]
  %s1 = inlined_call_operand.vmem [shape: f32[2,4], index: 1, kind: input, shape index: {}]
  %s2 = inlined_call_operand.vmem [shape: f32[9,4,32], index: 2, kind: input, shape index: {}]
  %s3 = inlined_call_operand.vmem [shape: f32[4,16], index: 3, kind: input, shape index: {}]
  %s4 = inlined_call_operand.vmem [shape: f32[16,32], index: 4, kind: input, shape index: {}]
  %s5 = inlined_call_operand.vmem [shape: f32[2,32,32], index: 5, kind: input, shape index: {}]
  %s6 = inlined_call_operand.vmem [shape: f32[32,11], index: 6, kind: input, shape index: {}]
  %s7 = inlined_call_operand.vmem [shape: f32[7,32], index: 7, kind: input, shape index: {}]
  %s8 = inlined_call_operand.hbm [shape: f32[2,5], index: 8, kind: output, shape index: {0}]
  %s9 = inlined_call_operand.hbm [shape: f32[2,6], index: 9, kind: output, shape index: {1}]
  %10 = xla_tuple %s8, %s9
  %s11 = sld [smem:[#allocation0]]
  $region50: #{model_forward.1} parent=0
    _
  %s13 = ssub.s32 1, %s11
  %s14 = scalar_select 0, %s13, %s11
  $region1: #{model_forward.1} parent=0
    #allocation2 [shape = 'u8[1024]{0}', space=vmem, size = 0x400, scoped, tag = 'output window, operand 0, single buffered']
    #allocation3 [shape = 's32[1]{0}', space=sflag, size = 0x4, scoped, tag = 'scoped memory for model_forward.1']
    #allocation4 [shape = 'u8[1024]{0}', space=vmem, size = 0x400, scoped, tag = 'output window, operand 1, single buffered']
    #allocation5 [shape = 's32[1]{0}', space=sflag, size = 0x4, scoped, tag = 'scoped memory for model_forward.1']
    %15 = vsyncpa [#allocation3], 0
    %16 = vsyncpa [#allocation5], 0
    // Predicated region
    $region2: #{model_forward.1} parent=1 // pred_check
      _
    $region3: #{model_forward.1} parent=1 // pred_check_branch
      %18 = sbr.rel (0) target = $region5
    $region4: #{model_forward.1} parent=1 // pred_region
      _
    $region5: #{model_forward.1} parent=1 // pred_fallthru
      _
    // Predicated region
    $region6: #{model_forward.1} parent=1 // pred_check
      _
    $region7: #{model_forward.1} parent=1 // pred_check_branch
      %20 = sbr.rel (0) target = $region9
    $region8: #{model_forward.1} parent=1 // pred_region
      _
    $region9: #{model_forward.1} parent=1 // pred_fallthru
      _
    // Predicated region
    $region10: #{model_forward.1} parent=1 // pred_check
      _
    $region11: #{model_forward.1} parent=1 // pred_check_branch
      %22 = sbr.rel (0) target = $region13
    $region12: #{model_forward.1} parent=1 // pred_region
      _
    $region13: #{model_forward.1} parent=1 // pred_fallthru
      _
    // Predicated region
    $region14: #{model_forward.1} parent=1 // pred_check
      _
    $region15: #{model_forward.1} parent=1 // pred_check_branch
      %24 = sbr.rel (0) target = $region17
    $region16: #{model_forward.1} parent=1 // pred_region
      _
    $region17: #{model_forward.1} parent=1 // pred_fallthru
      _
    // Predicated region
    $region18: #{model_forward.1} parent=1 // pred_check
      _
    $region19: #{model_forward.1} parent=1 // pred_check_branch
      %26 = sbr.rel (0) target = $region21
    $region20: #{model_forward.1} parent=1 // pred_region
      _
    $region21: #{model_forward.1} parent=1 // pred_fallthru
      _
    // Predicated region
    $region22: #{model_forward.1} parent=1 // pred_check
      _
    $region23: #{model_forward.1} parent=1 // pred_check_branch
      %28 = sbr.rel (0) target = $region25
    $region24: #{model_forward.1} parent=1 // pred_region
      _
    $region25: #{model_forward.1} parent=1 // pred_fallthru
      _
    // Predicated region
    $region26: #{model_forward.1} parent=1 // pred_check
      _
    $region27: #{model_forward.1} parent=1 // pred_check_branch
      %30 = sbr.rel (0) target = $region29
    $region28: #{model_forward.1} parent=1 // pred_region
      _
    $region29: #{model_forward.1} parent=1 // pred_fallthru
      _
    // Predicated region
    $region30: #{model_forward.1} parent=1 // pred_check
      _
    $region31: #{model_forward.1} parent=1 // pred_check_branch
      %32 = sbr.rel (0) target = $region33
    $region32: #{model_forward.1} parent=1 // pred_region
      _
    $region33: #{model_forward.1} parent=1 // pred_fallthru
      _
    %v33 = vld [vmem:[%s0] sm:$0xff]
    %v34 = vld [vmem:[%s0 + $0x8] sm:$0xff]
    %v35 = vld [vmem:[%s0 + $0x10] sm:$0x3]
    %v36 = vld [vmem:[%s0 + $0x18] sm:$0xff]
    %v37 = vld [vmem:[%s0 + $0x20] sm:$0xff]
    %v38 = vld [vmem:[%s0 + $0x28] sm:$0x3]
    %v39 = vld [vmem:[%s0 + $0x30] sm:$0xff]
    %v40 = vld [vmem:[%s0 + $0x38] sm:$0xff]
    %v41 = vld [vmem:[%s0 + $0x40] sm:$0x3]
    %v42 = vld [vmem:[%s0 + $0x48] sm:$0xff]
    %v43 = vld [vmem:[%s0 + $0x50] sm:$0xff]
    %v44 = vld [vmem:[%s0 + $0x58] sm:$0x3]
    %v45 = vld [vmem:[%s0 + $0x60] sm:$0xff]
    %v46 = vld [vmem:[%s0 + $0x68] sm:$0xff]
    %v47 = vld [vmem:[%s0 + $0x70] sm:$0x3]
    %v48 = vld [vmem:[%s0 + $0x78] sm:$0xff]
    %v49 = vld [vmem:[%s0 + $0x80] sm:$0xff]
    %v50 = vld [vmem:[%s0 + $0x88] sm:$0x3]
    %v51 = vld [vmem:[%s0 + $0x90] sm:$0xff]
    %v52 = vld [vmem:[%s0 + $0x98] sm:$0xff]
    %v53 = vld [vmem:[%s0 + $0xa0] sm:$0x3]
    %v54 = vld [vmem:[%s0 + $0xa8] sm:$0xff]
    %v55 = vld [vmem:[%s0 + $0xb0] sm:$0xff]
    %v56 = vld [vmem:[%s0 + $0xb8] sm:$0x3]
    %v57 = vld [vmem:[%s2] sm:$0xf]
    %v58 = vld [vmem:[%s2 + $0x4] sm:$0xf]
    %v59 = vld [vmem:[%s2 + $0x8] sm:$0xf]
    %v60 = vld [vmem:[%s2 + $0xc] sm:$0xf]
    %v61 = vld [vmem:[%s2 + $0x10] sm:$0xf]
    %v62 = vld [vmem:[%s2 + $0x14] sm:$0xf]
    %v63 = vld [vmem:[%s2 + $0x18] sm:$0xf]
    %v64 = vld [vmem:[%s2 + $0x1c] sm:$0xf]
    %v65 = vld [vmem:[%s2 + $0x20] sm:$0xf]
    %vm66 = vcmask 146432
    %v67 = vsel %vm66, %v33, 0.0
    %v68 = vsel %vm66, %v34, 0.0
    %v69 = vadd.f32 %v67, %v68
    %v70 = vrot.slane %v69, 4
    %v71 = vadd.f32 %v69, %v70
    %v72 = vrot.slane %v71, 2
    %v73 = vadd.f32 %v71, %v72
    %v74 = vrot.slane %v73, 1
    %v75 = vadd.f32 %v73, %v74
    %v76 = vsel %vm66, %v36, 0.0
    %v77 = vsel %vm66, %v37, 0.0
    %v78 = vadd.f32 %v76, %v77
    %v79 = vrot.slane %v78, 4
    %v80 = vadd.f32 %v78, %v79
    %v81 = vrot.slane %v80, 2
    %v82 = vadd.f32 %v80, %v81
    %v83 = vrot.slane %v82, 1
    %v84 = vadd.f32 %v82, %v83
    %v85 = vsel %vm66, %v39, 0.0
    %v86 = vsel %vm66, %v40, 0.0
    %v87 = vadd.f32 %v85, %v86
    %v88 = vrot.slane %v87, 4
    %v89 = vadd.f32 %v87, %v88
    %v90 = vrot.slane %v89, 2
    %v91 = vadd.f32 %v89, %v90
    %v92 = vrot.slane %v91, 1
    %v93 = vadd.f32 %v91, %v92
    %v94 = vsel %vm66, %v42, 0.0
    %v95 = vsel %vm66, %v43, 0.0
    %v96 = vadd.f32 %v94, %v95
    %v97 = vrot.slane %v96, 4
    %v98 = vadd.f32 %v96, %v97
    %v99 = vrot.slane %v98, 2
    %v100 = vadd.f32 %v98, %v99
    %v101 = vrot.slane %v100, 1
    %v102 = vadd.f32 %v100, %v101
    %v103 = vsel %vm66, %v45, 0.0
    %v104 = vsel %vm66, %v46, 0.0
    %v105 = vadd.f32 %v103, %v104
    %v106 = vrot.slane %v105, 4
    %v107 = vadd.f32 %v105, %v106
    %v108 = vrot.slane %v107, 2
    %v109 = vadd.f32 %v107, %v108
    %v110 = vrot.slane %v109, 1
    %v111 = vadd.f32 %v109, %v110
    %v112 = vsel %vm66, %v48, 0.0
    %v113 = vsel %vm66, %v49, 0.0
    %v114 = vadd.f32 %v112, %v113
    %v115 = vrot.slane %v114, 4
    %v116 = vadd.f32 %v114, %v115
    %v117 = vrot.slane %v116, 2
    %v118 = vadd.f32 %v116, %v117
    %v119 = vrot.slane %v118, 1
    %v120 = vadd.f32 %v118, %v119
    %v121 = vsel %vm66, %v51, 0.0
    %v122 = vsel %vm66, %v52, 0.0
    %v123 = vadd.f32 %v121, %v122
    %v124 = vrot.slane %v123, 4
    %v125 = vadd.f32 %v123, %v124
    %v126 = vrot.slane %v125, 2
    %v127 = vadd.f32 %v125, %v126
    %v128 = vrot.slane %v127, 1
    %v129 = vadd.f32 %v127, %v128
    %v130 = vsel %vm66, %v54, 0.0
    %v131 = vsel %vm66, %v55, 0.0
    %v132 = vadd.f32 %v130, %v131
    %v133 = vrot.slane %v132, 4
    %v134 = vadd.f32 %v132, %v133
    %v135 = vrot.slane %v134, 2
    %v136 = vadd.f32 %v134, %v135
    %v137 = vrot.slane %v136, 1
    %v138 = vadd.f32 %v136, %v137
    %vm147 = vcmask 1041409
    %v148 = vsel %vm147, %v84, %v75
    %vm149 = vcmask 1042434
    %v150 = vsel %vm149, %v93, %v148
    %vm151 = vcmask 1043459
    %v152 = vsel %vm151, %v102, %v150
    %v153 = vsel %vm147, %v120, %v111
    %v154 = vsel %vm149, %v129, %v153
    %v155 = vsel %vm151, %v138, %v154
    %vm158 = vcmask 125952
    %v159 = vsel %vm158, %v152, 0.0
    %160 = vadd.xlane.f32.xlu0 %v159
    %v161 = vpop.xlane.xlu0 %160
    %v162 = vsel %vm158, %v155, 0.0
    %163 = vadd.xlane.f32.xlu0 %v162
    %v164 = vpop.xlane.xlu0 %163
    %165 = vrot.lane.b32.xlu0 %v152, 127
    %v166 = vpop.permute.xlu0 %165
    %167 = vrot.lane.b32.xlu0 %v155, 127
    %v168 = vpop.permute.xlu0 %167
    %v171 = vsel %vm158, %v166, 0.0
    %172 = vadd.xlane.f32.xlu0 %v171
    %v173 = vpop.xlane.xlu0 %172
    %v174 = vsel %vm158, %v168, 0.0
    %175 = vadd.xlane.f32.xlu0 %v174
    %v176 = vpop.xlane.xlu0 %175
    %v179 = vlaneseq
    %v180 = vand.u32 %v179, 127
    %v181 = vlaneseq
    %v182 = vshrl.u32 %v181, 7
    %v183 = vsub.s32 %v180, %v182
    %v184 = vrot.slane %v173, %v183
    %v185 = vlaneseq
    %v186 = vshrl.u32 %v185, 7
    %v187 = vsub.s32 %v180, %v186
    %v188 = vrot.slane %v176, %v187
    %v189 = vsel %vm147, %v188, %v184
    %vm190 = vcmask 31744
    %v191 = vsel %vm190, %v189, 0
    %vm193 = vcmask 1043456
    %v195 = vsel %vm193, %v58, 0
    %197 = vmatprep.subr.mxu0 0.0
    %198 = vmatpush1.msra.mxu0 %v195
    %199 = vmatprep.subr.mxu0 0.0
    %200 = vmatpush1.msra.mxu0 0.0
    %201 = vmatprep.subr.mxu0 0.0
    %202 = vmatpush1.msra.mxu0 0.0
    %203 = vmatprep.subr.mxu0 0.0
    %204 = vmatpush1.msra.mxu0 0.0
    %205 = vmatprep.subr.mxu0 0.0
    %206 = vmatpush1.msra.mxu0 0.0
    %207 = vmatprep.subr.mxu0 0.0
    %208 = vmatpush1.msra.mxu0 0.0
    %209 = vmatprep.subr.mxu0 0.0
    %210 = vmatpush1.msra.mxu0 0.0
    %211 = vmatprep.subr.mxu0 0.0
    %212 = vmatpush1.msra.mxu0 0.0
    %213 = vmatprep.subr.mxu0 0.0
    %214 = vmatpush1.msra.mxu0 0.0
    %215 = vmatprep.subr.mxu0 0.0
    %216 = vmatpush1.msra.mxu0 0.0
    %217 = vmatprep.subr.mxu0 0.0
    %218 = vmatpush1.msra.mxu0 0.0
    %219 = vmatprep.subr.mxu0 0.0
    %220 = vmatpush1.msra.mxu0 0.0
    %221 = vmatprep.subr.mxu0 0.0
    %222 = vmatpush1.msra.mxu0 0.0
    %223 = vmatprep.subr.mxu0 0.0
    %224 = vmatpush1.msra.mxu0 0.0
    %225 = vmatprep.subr.mxu0 0.0
    %226 = vmatpush1.msra.mxu0 0.0
    %227 = vmatprep.subr.mxu0 0.0
    %228 = vmatpush1.msra.mxu0 0.0
    %229 = vmatprep.subr.mxu0 0.0
    %230 = vmatpush1.msra.mxu0 0.0
    %231 = vmatprep.subr.mxu0 0.0
    %232 = vmatpush1.msra.mxu0 0.0
    %233 = vmatprep.subr.mxu0 0.0
    %234 = vmatpush1.msra.mxu0 0.0
    %235 = vmatprep.subr.mxu0 0.0
    %236 = vmatpush1.msra.mxu0 0.0
    %237 = vmatprep.subr.mxu0 0.0
    %238 = vmatpush1.msra.mxu0 0.0
    %239 = vmatprep.subr.mxu0 0.0
    %240 = vmatpush1.msra.mxu0 0.0
    %241 = vmatprep.subr.mxu0 0.0
    %242 = vmatpush1.msra.mxu0 0.0
    %243 = vmatprep.subr.mxu0 0.0
    %244 = vmatpush1.msra.mxu0 0.0
    %245 = vmatprep.subr.mxu0 0.0
    %246 = vmatpush1.msra.mxu0 0.0
    %247 = vmatprep.subr.mxu0 0.0
    %248 = vmatpush1.msra.mxu0 0.0
    %249 = vmatprep.subr.mxu0 0.0
    %250 = vmatpush1.msra.mxu0 0.0
    %251 = vmatprep.subr.mxu0 0.0
    %252 = vmatpush1.msra.mxu0 0.0
    %253 = vmatprep.subr.mxu0 0.0
    %254 = vmatpush1.msra.mxu0 0.0
    %255 = vmatprep.subr.mxu0 0.0
    %256 = vmatpush1.msra.mxu0 0.0
    %257 = vmatprep.subr.mxu0 0.0
    %258 = vmatpush1.msra.mxu0 0.0
    %259 = vmatprep.subr.mxu0 0.0
    %260 = vmatpush1.msra.mxu0 0.0
    %261 = vmatprep.mubr.f32.mxu0 0.0
    %262 = vmatmul.mubr.f32.gmra.mrb[0].mxu0 %v191
    %v263 = vpop.f32.mrb[0].mxu0
    %v264 = vadd.f32 0.0, %v263
    %v265 = vpop.f32.mrb[0].mxu0
    %266 = vdwg.mxu0
    %v269 = vlaneseq
    %v270 = vshrl.u32 %v269, 7
    %v271 = vsub.s32 %v180, %v270
    %v272 = vrot.slane %v161, %v271
    %v273 = vlaneseq
    %v274 = vshrl.u32 %v273, 7
    %v275 = vsub.s32 %v180, %v274
    %v276 = vrot.slane %v164, %v275
    %v277 = vsel %vm147, %v276, %v272
    %v278 = vsel %vm190, %v277, 0
    %v281 = vsel %vm193, %v57, 0
    %283 = vmatprep.subr.mxu0 0.0
    %284 = vmatpush1.msra.mxu0 %v281
    %285 = vmatprep.subr.mxu0 0.0
    %286 = vmatpush1.msra.mxu0 0.0
    %287 = vmatprep.subr.mxu0 0.0
    %288 = vmatpush1.msra.mxu0 0.0
    %289 = vmatprep.subr.mxu0 0.0
    %290 = vmatpush1.msra.mxu0 0.0
    %291 = vmatprep.subr.mxu0 0.0
    %292 = vmatpush1.msra.mxu0 0.0
    %293 = vmatprep.subr.mxu0 0.0
    %294 = vmatpush1.msra.mxu0 0.0
    %295 = vmatprep.subr.mxu0 0.0
    %296 = vmatpush1.msra.mxu0 0.0
    %297 = vmatprep.subr.mxu0 0.0
    %298 = vmatpush1.msra.mxu0 0.0
    %299 = vmatprep.subr.mxu0 0.0
    %300 = vmatpush1.msra.mxu0 0.0
    %301 = vmatprep.subr.mxu0 0.0
    %302 = vmatpush1.msra.mxu0 0.0
    %303 = vmatprep.subr.mxu0 0.0
    %304 = vmatpush1.msra.mxu0 0.0
    %305 = vmatprep.subr.mxu0 0.0
    %306 = vmatpush1.msra.mxu0 0.0
    %307 = vmatprep.subr.mxu0 0.0
    %308 = vmatpush1.msra.mxu0 0.0
    %309 = vmatprep.subr.mxu0 0.0
    %310 = vmatpush1.msra.mxu0 0.0
    %311 = vmatprep.subr.mxu0 0.0
    %312 = vmatpush1.msra.mxu0 0.0
    %313 = vmatprep.subr.mxu0 0.0
    %314 = vmatpush1.msra.mxu0 0.0
    %315 = vmatprep.subr.mxu0 0.0
    %316 = vmatpush1.msra.mxu0 0.0
    %317 = vmatprep.subr.mxu0 0.0
    %318 = vmatpush1.msra.mxu0 0.0
    %319 = vmatprep.subr.mxu0 0.0
    %320 = vmatpush1.msra.mxu0 0.0
    %321 = vmatprep.subr.mxu0 0.0
    %322 = vmatpush1.msra.mxu0 0.0
    %323 = vmatprep.subr.mxu0 0.0
    %324 = vmatpush1.msra.mxu0 0.0
    %325 = vmatprep.subr.mxu0 0.0
    %326 = vmatpush1.msra.mxu0 0.0
    %327 = vmatprep.subr.mxu0 0.0
    %328 = vmatpush1.msra.mxu0 0.0
    %329 = vmatprep.subr.mxu0 0.0
    %330 = vmatpush1.msra.mxu0 0.0
    %331 = vmatprep.subr.mxu0 0.0
    %332 = vmatpush1.msra.mxu0 0.0
    %333 = vmatprep.subr.mxu0 0.0
    %334 = vmatpush1.msra.mxu0 0.0
    %335 = vmatprep.subr.mxu0 0.0
    %336 = vmatpush1.msra.mxu0 0.0
    %337 = vmatprep.subr.mxu0 0.0
    %338 = vmatpush1.msra.mxu0 0.0
    %339 = vmatprep.subr.mxu0 0.0
    %340 = vmatpush1.msra.mxu0 0.0
    %341 = vmatprep.subr.mxu0 0.0
    %342 = vmatpush1.msra.mxu0 0.0
    %343 = vmatprep.subr.mxu0 0.0
    %344 = vmatpush1.msra.mxu0 0.0
    %345 = vmatprep.subr.mxu0 0.0
    %346 = vmatpush1.msra.mxu0 0.0
    %347 = vmatprep.mubr.f32.mxu0 0.0
    %348 = vmatmul.mubr.f32.gmra.mrb[0].mxu0 %v278
    %v349 = vpop.f32.mrb[0].mxu0
    %v350 = vadd.f32 %v264, %v349
    %v351 = vpop.f32.mrb[0].mxu0
    %352 = vdwg.mxu0
    %353 = vrot.lane.b32.xlu0 %v152, 126
    %v354 = vpop.permute.xlu0 %353
    %355 = vrot.lane.b32.xlu0 %v155, 126
    %v356 = vpop.permute.xlu0 %355
    %v359 = vsel %vm158, %v354, 0.0
    %360 = vadd.xlane.f32.xlu0 %v359
    %v361 = vpop.xlane.xlu0 %360
    %v362 = vsel %vm158, %v356, 0.0
    %363 = vadd.xlane.f32.xlu0 %v362
    %v364 = vpop.xlane.xlu0 %363
    %v367 = vlaneseq
    %v368 = vshrl.u32 %v367, 7
    %v369 = vsub.s32 %v180, %v368
    %v370 = vrot.slane %v361, %v369
    %v371 = vlaneseq
    %v372 = vshrl.u32 %v371, 7
    %v373 = vsub.s32 %v180, %v372
    %v374 = vrot.slane %v364, %v373
    %v375 = vsel %vm147, %v374, %v370
    %v376 = vsel %vm190, %v375, 0
    %v379 = vsel %vm193, %v59, 0
    %381 = vmatprep.subr.mxu0 0.0
    %382 = vmatpush1.msra.mxu0 %v379
    %383 = vmatprep.subr.mxu0 0.0
    %384 = vmatpush1.msra.mxu0 0.0
    %385 = vmatprep.subr.mxu0 0.0
    %386 = vmatpush1.msra.mxu0 0.0
    %387 = vmatprep.subr.mxu0 0.0
    %388 = vmatpush1.msra.mxu0 0.0
    %389 = vmatprep.subr.mxu0 0.0
    %390 = vmatpush1.msra.mxu0 0.0
    %391 = vmatprep.subr.mxu0 0.0
    %392 = vmatpush1.msra.mxu0 0.0
    %393 = vmatprep.subr.mxu0 0.0
    %394 = vmatpush1.msra.mxu0 0.0
    %395 = vmatprep.subr.mxu0 0.0
    %396 = vmatpush1.msra.mxu0 0.0
    %397 = vmatprep.subr.mxu0 0.0
    %398 = vmatpush1.msra.mxu0 0.0
    %399 = vmatprep.subr.mxu0 0.0
    %400 = vmatpush1.msra.mxu0 0.0
    %401 = vmatprep.subr.mxu0 0.0
    %402 = vmatpush1.msra.mxu0 0.0
    %403 = vmatprep.subr.mxu0 0.0
    %404 = vmatpush1.msra.mxu0 0.0
    %405 = vmatprep.subr.mxu0 0.0
    %406 = vmatpush1.msra.mxu0 0.0
    %407 = vmatprep.subr.mxu0 0.0
    %408 = vmatpush1.msra.mxu0 0.0
    %409 = vmatprep.subr.mxu0 0.0
    %410 = vmatpush1.msra.mxu0 0.0
    %411 = vmatprep.subr.mxu0 0.0
    %412 = vmatpush1.msra.mxu0 0.0
    %413 = vmatprep.subr.mxu0 0.0
    %414 = vmatpush1.msra.mxu0 0.0
    %415 = vmatprep.subr.mxu0 0.0
    %416 = vmatpush1.msra.mxu0 0.0
    %417 = vmatprep.subr.mxu0 0.0
    %418 = vmatpush1.msra.mxu0 0.0
    %419 = vmatprep.subr.mxu0 0.0
    %420 = vmatpush1.msra.mxu0 0.0
    %421 = vmatprep.subr.mxu0 0.0
    %422 = vmatpush1.msra.mxu0 0.0
    %423 = vmatprep.subr.mxu0 0.0
    %424 = vmatpush1.msra.mxu0 0.0
    %425 = vmatprep.subr.mxu0 0.0
    %426 = vmatpush1.msra.mxu0 0.0
    %427 = vmatprep.subr.mxu0 0.0
    %428 = vmatpush1.msra.mxu0 0.0
    %429 = vmatprep.subr.mxu0 0.0
    %430 = vmatpush1.msra.mxu0 0.0
    %431 = vmatprep.subr.mxu0 0.0
    %432 = vmatpush1.msra.mxu0 0.0
    %433 = vmatprep.subr.mxu0 0.0
    %434 = vmatpush1.msra.mxu0 0.0
    %435 = vmatprep.subr.mxu0 0.0
    %436 = vmatpush1.msra.mxu0 0.0
    %437 = vmatprep.subr.mxu0 0.0
    %438 = vmatpush1.msra.mxu0 0.0
    %439 = vmatprep.subr.mxu0 0.0
    %440 = vmatpush1.msra.mxu0 0.0
    %441 = vmatprep.subr.mxu0 0.0
    %442 = vmatpush1.msra.mxu0 0.0
    %443 = vmatprep.subr.mxu0 0.0
    %444 = vmatpush1.msra.mxu0 0.0
    %445 = vmatprep.mubr.f32.mxu0 0.0
    %446 = vmatmul.mubr.f32.gmra.mrb[0].mxu0 %v376
    %v447 = vpop.f32.mrb[0].mxu0
    %v448 = vadd.f32 0.0, %v447
    %v449 = vpop.f32.mrb[0].mxu0
    %450 = vdwg.mxu0
    %v451 = vadd.f32 %v350, %v448
    %vm476 = vcmask 1046528
    %v477 = vrot.slane %v33, 1
    %v478 = vrot.slane %v34, 1
    %v479 = vsel %vm476, %v477, %v478
    %v480 = vrot.slane %v35, 1
    %v481 = vsel %vm476, %v478, %v480
    %v482 = vrot.slane %v36, 1
    %v483 = vrot.slane %v37, 1
    %v484 = vsel %vm476, %v482, %v483
    %v485 = vrot.slane %v38, 1
    %v486 = vsel %vm476, %v483, %v485
    %v487 = vrot.slane %v39, 1
    %v488 = vrot.slane %v40, 1
    %v489 = vsel %vm476, %v487, %v488
    %v490 = vrot.slane %v41, 1
    %v491 = vsel %vm476, %v488, %v490
    %v492 = vrot.slane %v42, 1
    %v493 = vrot.slane %v43, 1
    %v494 = vsel %vm476, %v492, %v493
    %v495 = vrot.slane %v44, 1
    %v496 = vsel %vm476, %v493, %v495
    %v497 = vrot.slane %v45, 1
    %v498 = vrot.slane %v46, 1
    %v499 = vsel %vm476, %v497, %v498
    %v500 = vrot.slane %v47, 1
    %v501 = vsel %vm476, %v498, %v500
    %v502 = vrot.slane %v48, 1
    %v503 = vrot.slane %v49, 1
    %v504 = vsel %vm476, %v502, %v503
    %v505 = vrot.slane %v50, 1
    %v506 = vsel %vm476, %v503, %v505
    %v507 = vrot.slane %v51, 1
    %v508 = vrot.slane %v52, 1
    %v509 = vsel %vm476, %v507, %v508
    %v510 = vrot.slane %v53, 1
    %v511 = vsel %vm476, %v508, %v510
    %v512 = vrot.slane %v54, 1
    %v513 = vrot.slane %v55, 1
    %v514 = vsel %vm476, %v512, %v513
    %v515 = vrot.slane %v56, 1
    %v516 = vsel %vm476, %v513, %v515
    %v533 = vsel %vm66, %v479, 0.0
    %v534 = vsel %vm66, %v481, 0.0
    %v535 = vadd.f32 %v533, %v534
    %v536 = vrot.slane %v535, 4
    %v537 = vadd.f32 %v535, %v536
    %v538 = vrot.slane %v537, 2
    %v539 = vadd.f32 %v537, %v538
    %v540 = vrot.slane %v539, 1
    %v541 = vadd.f32 %v539, %v540
    %v542 = vsel %vm66, %v484, 0.0
    %v543 = vsel %vm66, %v486, 0.0
    %v544 = vadd.f32 %v542, %v543
    %v545 = vrot.slane %v544, 4
    %v546 = vadd.f32 %v544, %v545
    %v547 = vrot.slane %v546, 2
    %v548 = vadd.f32 %v546, %v547
    %v549 = vrot.slane %v548, 1
    %v550 = vadd.f32 %v548, %v549
    %v551 = vsel %vm66, %v489, 0.0
    %v552 = vsel %vm66, %v491, 0.0
    %v553 = vadd.f32 %v551, %v552
    %v554 = vrot.slane %v553, 4
    %v555 = vadd.f32 %v553, %v554
    %v556 = vrot.slane %v555, 2
    %v557 = vadd.f32 %v555, %v556
    %v558 = vrot.slane %v557, 1
    %v559 = vadd.f32 %v557, %v558
    %v560 = vsel %vm66, %v494, 0.0
    %v561 = vsel %vm66, %v496, 0.0
    %v562 = vadd.f32 %v560, %v561
    %v563 = vrot.slane %v562, 4
    %v564 = vadd.f32 %v562, %v563
    %v565 = vrot.slane %v564, 2
    %v566 = vadd.f32 %v564, %v565
    %v567 = vrot.slane %v566, 1
    %v568 = vadd.f32 %v566, %v567
    %v569 = vsel %vm66, %v499, 0.0
    %v570 = vsel %vm66, %v501, 0.0
    %v571 = vadd.f32 %v569, %v570
    %v572 = vrot.slane %v571, 4
    %v573 = vadd.f32 %v571, %v572
    %v574 = vrot.slane %v573, 2
    %v575 = vadd.f32 %v573, %v574
    %v576 = vrot.slane %v575, 1
    %v577 = vadd.f32 %v575, %v576
    %v578 = vsel %vm66, %v504, 0.0
    %v579 = vsel %vm66, %v506, 0.0
    %v580 = vadd.f32 %v578, %v579
    %v581 = vrot.slane %v580, 4
    %v582 = vadd.f32 %v580, %v581
    %v583 = vrot.slane %v582, 2
    %v584 = vadd.f32 %v582, %v583
    %v585 = vrot.slane %v584, 1
    %v586 = vadd.f32 %v584, %v585
    %v587 = vsel %vm66, %v509, 0.0
    %v588 = vsel %vm66, %v511, 0.0
    %v589 = vadd.f32 %v587, %v588
    %v590 = vrot.slane %v589, 4
    %v591 = vadd.f32 %v589, %v590
    %v592 = vrot.slane %v591, 2
    %v593 = vadd.f32 %v591, %v592
    %v594 = vrot.slane %v593, 1
    %v595 = vadd.f32 %v593, %v594
    %v596 = vsel %vm66, %v514, 0.0
    %v597 = vsel %vm66, %v516, 0.0
    %v598 = vadd.f32 %v596, %v597
    %v599 = vrot.slane %v598, 4
    %v600 = vadd.f32 %v598, %v599
    %v601 = vrot.slane %v600, 2
    %v602 = vadd.f32 %v600, %v601
    %v603 = vrot.slane %v602, 1
    %v604 = vadd.f32 %v602, %v603
    %v613 = vsel %vm147, %v550, %v541
    %v614 = vsel %vm149, %v559, %v613
    %v615 = vsel %vm151, %v568, %v614
    %v616 = vsel %vm147, %v586, %v577
    %v617 = vsel %vm149, %v595, %v616
    %v618 = vsel %vm151, %v604, %v617
    %v621 = vsel %vm158, %v615, 0.0
    %622 = vadd.xlane.f32.xlu0 %v621
    %v623 = vpop.xlane.xlu0 %622
    %v624 = vsel %vm158, %v618, 0.0
    %625 = vadd.xlane.f32.xlu0 %v624
    %v626 = vpop.xlane.xlu0 %625
    %v629 = vlaneseq
    %v630 = vshrl.u32 %v629, 7
    %v631 = vsub.s32 %v180, %v630
    %v632 = vrot.slane %v623, %v631
    %v633 = vlaneseq
    %v634 = vshrl.u32 %v633, 7
    %v635 = vsub.s32 %v180, %v634
    %v636 = vrot.slane %v626, %v635
    %v637 = vsel %vm147, %v636, %v632
    %v638 = vsel %vm190, %v637, 0
    %v641 = vsel %vm193, %v60, 0
    %643 = vmatprep.subr.mxu0 0.0
    %644 = vmatpush1.msra.mxu0 %v641
    %645 = vmatprep.subr.mxu0 0.0
    %646 = vmatpush1.msra.mxu0 0.0
    %647 = vmatprep.subr.mxu0 0.0
    %648 = vmatpush1.msra.mxu0 0.0
    %649 = vmatprep.subr.mxu0 0.0
    %650 = vmatpush1.msra.mxu0 0.0
    %651 = vmatprep.subr.mxu0 0.0
    %652 = vmatpush1.msra.mxu0 0.0
    %653 = vmatprep.subr.mxu0 0.0
    %654 = vmatpush1.msra.mxu0 0.0
    %655 = vmatprep.subr.mxu0 0.0
    %656 = vmatpush1.msra.mxu0 0.0
    %657 = vmatprep.subr.mxu0 0.0
    %658 = vmatpush1.msra.mxu0 0.0
    %659 = vmatprep.subr.mxu0 0.0
    %660 = vmatpush1.msra.mxu0 0.0
    %661 = vmatprep.subr.mxu0 0.0
    %662 = vmatpush1.msra.mxu0 0.0
    %663 = vmatprep.subr.mxu0 0.0
    %664 = vmatpush1.msra.mxu0 0.0
    %665 = vmatprep.subr.mxu0 0.0
    %666 = vmatpush1.msra.mxu0 0.0
    %667 = vmatprep.subr.mxu0 0.0
    %668 = vmatpush1.msra.mxu0 0.0
    %669 = vmatprep.subr.mxu0 0.0
    %670 = vmatpush1.msra.mxu0 0.0
    %671 = vmatprep.subr.mxu0 0.0
    %672 = vmatpush1.msra.mxu0 0.0
    %673 = vmatprep.subr.mxu0 0.0
    %674 = vmatpush1.msra.mxu0 0.0
    %675 = vmatprep.subr.mxu0 0.0
    %676 = vmatpush1.msra.mxu0 0.0
    %677 = vmatprep.subr.mxu0 0.0
    %678 = vmatpush1.msra.mxu0 0.0
    %679 = vmatprep.subr.mxu0 0.0
    %680 = vmatpush1.msra.mxu0 0.0
    %681 = vmatprep.subr.mxu0 0.0
    %682 = vmatpush1.msra.mxu0 0.0
    %683 = vmatprep.subr.mxu0 0.0
    %684 = vmatpush1.msra.mxu0 0.0
    %685 = vmatprep.subr.mxu0 0.0
    %686 = vmatpush1.msra.mxu0 0.0
    %687 = vmatprep.subr.mxu0 0.0
    %688 = vmatpush1.msra.mxu0 0.0
    %689 = vmatprep.subr.mxu0 0.0
    %690 = vmatpush1.msra.mxu0 0.0
    %691 = vmatprep.subr.mxu0 0.0
    %692 = vmatpush1.msra.mxu0 0.0
    %693 = vmatprep.subr.mxu0 0.0
    %694 = vmatpush1.msra.mxu0 0.0
    %695 = vmatprep.subr.mxu0 0.0
    %696 = vmatpush1.msra.mxu0 0.0
    %697 = vmatprep.subr.mxu0 0.0
    %698 = vmatpush1.msra.mxu0 0.0
    %699 = vmatprep.subr.mxu0 0.0
    %700 = vmatpush1.msra.mxu0 0.0
    %701 = vmatprep.subr.mxu0 0.0
    %702 = vmatpush1.msra.mxu0 0.0
    %703 = vmatprep.subr.mxu0 0.0
    %704 = vmatpush1.msra.mxu0 0.0
    %705 = vmatprep.subr.mxu0 0.0
    %706 = vmatpush1.msra.mxu0 0.0
    %707 = vmatprep.mubr.f32.mxu0 0.0
    %708 = vmatmul.mubr.f32.gmra.mrb[0].mxu0 %v638
    %v709 = vpop.f32.mrb[0].mxu0
    %v710 = vadd.f32 0.0, %v709
    %v711 = vpop.f32.mrb[0].mxu0
    %712 = vdwg.mxu0
    %v713 = vadd.f32 %v451, %v710
    %714 = vrot.lane.b32.xlu0 %v615, 127
    %v715 = vpop.permute.xlu0 %714
    %716 = vrot.lane.b32.xlu0 %v618, 127
    %v717 = vpop.permute.xlu0 %716
    %v720 = vsel %vm158, %v715, 0.0
    %721 = vadd.xlane.f32.xlu0 %v720
    %v722 = vpop.xlane.xlu0 %721
    %v723 = vsel %vm158, %v717, 0.0
    %724 = vadd.xlane.f32.xlu0 %v723
    %v725 = vpop.xlane.xlu0 %724
    %v728 = vlaneseq
    %v729 = vshrl.u32 %v728, 7
    %v730 = vsub.s32 %v180, %v729
    %v731 = vrot.slane %v722, %v730
    %v732 = vlaneseq
    %v733 = vshrl.u32 %v732, 7
    %v734 = vsub.s32 %v180, %v733
    %v735 = vrot.slane %v725, %v734
    %v736 = vsel %vm147, %v735, %v731
    %v737 = vsel %vm190, %v736, 0
    %v740 = vsel %vm193, %v61, 0
    %742 = vmatprep.subr.mxu0 0.0
    %743 = vmatpush1.msra.mxu0 %v740
    %744 = vmatprep.subr.mxu0 0.0
    %745 = vmatpush1.msra.mxu0 0.0
    %746 = vmatprep.subr.mxu0 0.0
    %747 = vmatpush1.msra.mxu0 0.0
    %748 = vmatprep.subr.mxu0 0.0
    %749 = vmatpush1.msra.mxu0 0.0
    %750 = vmatprep.subr.mxu0 0.0
    %751 = vmatpush1.msra.mxu0 0.0
    %752 = vmatprep.subr.mxu0 0.0
    %753 = vmatpush1.msra.mxu0 0.0
    %754 = vmatprep.subr.mxu0 0.0
    %755 = vmatpush1.msra.mxu0 0.0
    %756 = vmatprep.subr.mxu0 0.0
    %757 = vmatpush1.msra.mxu0 0.0
    %758 = vmatprep.subr.mxu0 0.0
    %759 = vmatpush1.msra.mxu0 0.0
    %760 = vmatprep.subr.mxu0 0.0
    %761 = vmatpush1.msra.mxu0 0.0
    %762 = vmatprep.subr.mxu0 0.0
    %763 = vmatpush1.msra.mxu0 0.0
    %764 = vmatprep.subr.mxu0 0.0
    %765 = vmatpush1.msra.mxu0 0.0
    %766 = vmatprep.subr.mxu0 0.0
    %767 = vmatpush1.msra.mxu0 0.0
    %768 = vmatprep.subr.mxu0 0.0
    %769 = vmatpush1.msra.mxu0 0.0
    %770 = vmatprep.subr.mxu0 0.0
    %771 = vmatpush1.msra.mxu0 0.0
    %772 = vmatprep.subr.mxu0 0.0
    %773 = vmatpush1.msra.mxu0 0.0
    %774 = vmatprep.subr.mxu0 0.0
    %775 = vmatpush1.msra.mxu0 0.0
    %776 = vmatprep.subr.mxu0 0.0
    %777 = vmatpush1.msra.mxu0 0.0
    %778 = vmatprep.subr.mxu0 0.0
    %779 = vmatpush1.msra.mxu0 0.0
    %780 = vmatprep.subr.mxu0 0.0
    %781 = vmatpush1.msra.mxu0 0.0
    %782 = vmatprep.subr.mxu0 0.0
    %783 = vmatpush1.msra.mxu0 0.0
    %784 = vmatprep.subr.mxu0 0.0
    %785 = vmatpush1.msra.mxu0 0.0
    %786 = vmatprep.subr.mxu0 0.0
    %787 = vmatpush1.msra.mxu0 0.0
    %788 = vmatprep.subr.mxu0 0.0
    %789 = vmatpush1.msra.mxu0 0.0
    %790 = vmatprep.subr.mxu0 0.0
    %791 = vmatpush1.msra.mxu0 0.0
    %792 = vmatprep.subr.mxu0 0.0
    %793 = vmatpush1.msra.mxu0 0.0
    %794 = vmatprep.subr.mxu0 0.0
    %795 = vmatpush1.msra.mxu0 0.0
    %796 = vmatprep.subr.mxu0 0.0
    %797 = vmatpush1.msra.mxu0 0.0
    %798 = vmatprep.subr.mxu0 0.0
    %799 = vmatpush1.msra.mxu0 0.0
    %800 = vmatprep.subr.mxu0 0.0
    %801 = vmatpush1.msra.mxu0 0.0
    %802 = vmatprep.subr.mxu0 0.0
    %803 = vmatpush1.msra.mxu0 0.0
    %804 = vmatprep.subr.mxu0 0.0
    %805 = vmatpush1.msra.mxu0 0.0
    %806 = vmatprep.mubr.f32.mxu0 0.0
    %807 = vmatmul.mubr.f32.gmra.mrb[0].mxu0 %v737
    %v808 = vpop.f32.mrb[0].mxu0
    %v809 = vadd.f32 0.0, %v808
    %v810 = vpop.f32.mrb[0].mxu0
    %811 = vdwg.mxu0
    %v812 = vadd.f32 %v713, %v809
    %813 = vrot.lane.b32.xlu0 %v615, 126
    %v814 = vpop.permute.xlu0 %813
    %815 = vrot.lane.b32.xlu0 %v618, 126
    %v816 = vpop.permute.xlu0 %815
    %v819 = vsel %vm158, %v814, 0.0
    %820 = vadd.xlane.f32.xlu0 %v819
    %v821 = vpop.xlane.xlu0 %820
    %v822 = vsel %vm158, %v816, 0.0
    %823 = vadd.xlane.f32.xlu0 %v822
    %v824 = vpop.xlane.xlu0 %823
    %v827 = vlaneseq
    %v828 = vshrl.u32 %v827, 7
    %v829 = vsub.s32 %v180, %v828
    %v830 = vrot.slane %v821, %v829
    %v831 = vlaneseq
    %v832 = vshrl.u32 %v831, 7
    %v833 = vsub.s32 %v180, %v832
    %v834 = vrot.slane %v824, %v833
    %v835 = vsel %vm147, %v834, %v830
    %v836 = vsel %vm190, %v835, 0
    %v839 = vsel %vm193, %v62, 0
    %841 = vmatprep.subr.mxu0 0.0
    %842 = vmatpush1.msra.mxu0 %v839
    %843 = vmatprep.subr.mxu0 0.0
    %844 = vmatpush1.msra.mxu0 0.0
    %845 = vmatprep.subr.mxu0 0.0
    %846 = vmatpush1.msra.mxu0 0.0
    %847 = vmatprep.subr.mxu0 0.0
    %848 = vmatpush1.msra.mxu0 0.0
    %849 = vmatprep.subr.mxu0 0.0
    %850 = vmatpush1.msra.mxu0 0.0
    %851 = vmatprep.subr.mxu0 0.0
    %852 = vmatpush1.msra.mxu0 0.0
    %853 = vmatprep.subr.mxu0 0.0
    %854 = vmatpush1.msra.mxu0 0.0
    %855 = vmatprep.subr.mxu0 0.0
    %856 = vmatpush1.msra.mxu0 0.0
    %857 = vmatprep.subr.mxu0 0.0
    %858 = vmatpush1.msra.mxu0 0.0
    %859 = vmatprep.subr.mxu0 0.0
    %860 = vmatpush1.msra.mxu0 0.0
    %861 = vmatprep.subr.mxu0 0.0
    %862 = vmatpush1.msra.mxu0 0.0
    %863 = vmatprep.subr.mxu0 0.0
    %864 = vmatpush1.msra.mxu0 0.0
    %865 = vmatprep.subr.mxu0 0.0
    %866 = vmatpush1.msra.mxu0 0.0
    %867 = vmatprep.subr.mxu0 0.0
    %868 = vmatpush1.msra.mxu0 0.0
    %869 = vmatprep.subr.mxu0 0.0
    %870 = vmatpush1.msra.mxu0 0.0
    %871 = vmatprep.subr.mxu0 0.0
    %872 = vmatpush1.msra.mxu0 0.0
    %873 = vmatprep.subr.mxu0 0.0
    %874 = vmatpush1.msra.mxu0 0.0
    %875 = vmatprep.subr.mxu0 0.0
    %876 = vmatpush1.msra.mxu0 0.0
    %877 = vmatprep.subr.mxu0 0.0
    %878 = vmatpush1.msra.mxu0 0.0
    %879 = vmatprep.subr.mxu0 0.0
    %880 = vmatpush1.msra.mxu0 0.0
    %881 = vmatprep.subr.mxu0 0.0
    %882 = vmatpush1.msra.mxu0 0.0
    %883 = vmatprep.subr.mxu0 0.0
    %884 = vmatpush1.msra.mxu0 0.0
    %885 = vmatprep.subr.mxu0 0.0
    %886 = vmatpush1.msra.mxu0 0.0
    %887 = vmatprep.subr.mxu0 0.0
    %888 = vmatpush1.msra.mxu0 0.0
    %889 = vmatprep.subr.mxu0 0.0
    %890 = vmatpush1.msra.mxu0 0.0
    %891 = vmatprep.subr.mxu0 0.0
    %892 = vmatpush1.msra.mxu0 0.0
    %893 = vmatprep.subr.mxu0 0.0
    %894 = vmatpush1.msra.mxu0 0.0
    %895 = vmatprep.subr.mxu0 0.0
    %896 = vmatpush1.msra.mxu0 0.0
    %897 = vmatprep.subr.mxu0 0.0
    %898 = vmatpush1.msra.mxu0 0.0
    %899 = vmatprep.subr.mxu0 0.0
    %900 = vmatpush1.msra.mxu0 0.0
    %901 = vmatprep.subr.mxu0 0.0
    %902 = vmatpush1.msra.mxu0 0.0
    %903 = vmatprep.subr.mxu0 0.0
    %904 = vmatpush1.msra.mxu0 0.0
    %905 = vmatprep.mubr.f32.mxu0 0.0
    %906 = vmatmul.mubr.f32.gmra.mrb[0].mxu0 %v836
    %v907 = vpop.f32.mrb[0].mxu0
    %v908 = vadd.f32 0.0, %v907
    %v909 = vpop.f32.mrb[0].mxu0
    %910 = vdwg.mxu0
    %v911 = vadd.f32 %v812, %v908
    %vm912 = vcmask 1045504
    %v913 = vrot.slane %v33, 2
    %v914 = vrot.slane %v34, 2
    %v915 = vsel %vm912, %v913, %v914
    %v916 = vrot.slane %v35, 2
    %v917 = vsel %vm912, %v914, %v916
    %v918 = vrot.slane %v36, 2
    %v919 = vrot.slane %v37, 2
    %v920 = vsel %vm912, %v918, %v919
    %v921 = vrot.slane %v38, 2
    %v922 = vsel %vm912, %v919, %v921
    %v923 = vrot.slane %v39, 2
    %v924 = vrot.slane %v40, 2
    %v925 = vsel %vm912, %v923, %v924
    %v926 = vrot.slane %v41, 2
    %v927 = vsel %vm912, %v924, %v926
    %v928 = vrot.slane %v42, 2
    %v929 = vrot.slane %v43, 2
    %v930 = vsel %vm912, %v928, %v929
    %v931 = vrot.slane %v44, 2
    %v932 = vsel %vm912, %v929, %v931
    %v933 = vrot.slane %v45, 2
    %v934 = vrot.slane %v46, 2
    %v935 = vsel %vm912, %v933, %v934
    %v936 = vrot.slane %v47, 2
    %v937 = vsel %vm912, %v934, %v936
    %v938 = vrot.slane %v48, 2
    %v939 = vrot.slane %v49, 2
    %v940 = vsel %vm912, %v938, %v939
    %v941 = vrot.slane %v50, 2
    %v942 = vsel %vm912, %v939, %v941
    %v943 = vrot.slane %v51, 2
    %v944 = vrot.slane %v52, 2
    %v945 = vsel %vm912, %v943, %v944
    %v946 = vrot.slane %v53, 2
    %v947 = vsel %vm912, %v944, %v946
    %v948 = vrot.slane %v54, 2
    %v949 = vrot.slane %v55, 2
    %v950 = vsel %vm912, %v948, %v949
    %v951 = vrot.slane %v56, 2
    %v952 = vsel %vm912, %v949, %v951
    %v969 = vsel %vm66, %v915, 0.0
    %v970 = vsel %vm66, %v917, 0.0
    %v971 = vadd.f32 %v969, %v970
    %v972 = vrot.slane %v971, 4
    %v973 = vadd.f32 %v971, %v972
    %v974 = vrot.slane %v973, 2
    %v975 = vadd.f32 %v973, %v974
    %v976 = vrot.slane %v975, 1
    %v977 = vadd.f32 %v975, %v976
    %v978 = vsel %vm66, %v920, 0.0
    %v979 = vsel %vm66, %v922, 0.0
    %v980 = vadd.f32 %v978, %v979
    %v981 = vrot.slane %v980, 4
    %v982 = vadd.f32 %v980, %v981
    %v983 = vrot.slane %v982, 2
    %v984 = vadd.f32 %v982, %v983
    %v985 = vrot.slane %v984, 1
    %v986 = vadd.f32 %v984, %v985
    %v987 = vsel %vm66, %v925, 0.0
    %v988 = vsel %vm66, %v927, 0.0
    %v989 = vadd.f32 %v987, %v988
    %v990 = vrot.slane %v989, 4
    %v991 = vadd.f32 %v989, %v990
    %v992 = vrot.slane %v991, 2
    %v993 = vadd.f32 %v991, %v992
    %v994 = vrot.slane %v993, 1
    %v995 = vadd.f32 %v993, %v994
    %v996 = vsel %vm66, %v930, 0.0
    %v997 = vsel %vm66, %v932, 0.0
    %v998 = vadd.f32 %v996, %v997
    %v999 = vrot.slane %v998, 4
    %v1000 = vadd.f32 %v998, %v999
    %v1001 = vrot.slane %v1000, 2
    %v1002 = vadd.f32 %v1000, %v1001
    %v1003 = vrot.slane %v1002, 1
    %v1004 = vadd.f32 %v1002, %v1003
    %v1005 = vsel %vm66, %v935, 0.0
    %v1006 = vsel %vm66, %v937, 0.0
    %v1007 = vadd.f32 %v1005, %v1006
    %v1008 = vrot.slane %v1007, 4
    %v1009 = vadd.f32 %v1007, %v1008
    %v1010 = vrot.slane %v1009, 2
    %v1011 = vadd.f32 %v1009, %v1010
    %v1012 = vrot.slane %v1011, 1
    %v1013 = vadd.f32 %v1011, %v1012
    %v1014 = vsel %vm66, %v940, 0.0
    %v1015 = vsel %vm66, %v942, 0.0
    %v1016 = vadd.f32 %v1014, %v1015
    %v1017 = vrot.slane %v1016, 4
    %v1018 = vadd.f32 %v1016, %v1017
    %v1019 = vrot.slane %v1018, 2
    %v1020 = vadd.f32 %v1018, %v1019
    %v1021 = vrot.slane %v1020, 1
    %v1022 = vadd.f32 %v1020, %v1021
    %v1023 = vsel %vm66, %v945, 0.0
    %v1024 = vsel %vm66, %v947, 0.0
    %v1025 = vadd.f32 %v1023, %v1024
    %v1026 = vrot.slane %v1025, 4
    %v1027 = vadd.f32 %v1025, %v1026
    %v1028 = vrot.slane %v1027, 2
    %v1029 = vadd.f32 %v1027, %v1028
    %v1030 = vrot.slane %v1029, 1
    %v1031 = vadd.f32 %v1029, %v1030
    %v1032 = vsel %vm66, %v950, 0.0
    %v1033 = vsel %vm66, %v952, 0.0
    %v1034 = vadd.f32 %v1032, %v1033
    %v1035 = vrot.slane %v1034, 4
    %v1036 = vadd.f32 %v1034, %v1035
    %v1037 = vrot.slane %v1036, 2
    %v1038 = vadd.f32 %v1036, %v1037
    %v1039 = vrot.slane %v1038, 1
    %v1040 = vadd.f32 %v1038, %v1039
    %v1049 = vsel %vm147, %v986, %v977
    %v1050 = vsel %vm149, %v995, %v1049
    %v1051 = vsel %vm151, %v1004, %v1050
    %v1052 = vsel %vm147, %v1022, %v1013
    %v1053 = vsel %vm149, %v1031, %v1052
    %v1054 = vsel %vm151, %v1040, %v1053
    %v1057 = vsel %vm158, %v1051, 0.0
    %1058 = vadd.xlane.f32.xlu0 %v1057
    %v1059 = vpop.xlane.xlu0 %1058
    %v1060 = vsel %vm158, %v1054, 0.0
    %1061 = vadd.xlane.f32.xlu0 %v1060
    %v1062 = vpop.xlane.xlu0 %1061
    %v1065 = vlaneseq
    %v1066 = vshrl.u32 %v1065, 7
    %v1067 = vsub.s32 %v180, %v1066
    %v1068 = vrot.slane %v1059, %v1067
    %v1069 = vlaneseq
    %v1070 = vshrl.u32 %v1069, 7
    %v1071 = vsub.s32 %v180, %v1070
    %v1072 = vrot.slane %v1062, %v1071
    %v1073 = vsel %vm147, %v1072, %v1068
    %v1074 = vsel %vm190, %v1073, 0
    %v1077 = vsel %vm193, %v63, 0
    %1079 = vmatprep.subr.mxu0 0.0
    %1080 = vmatpush1.msra.mxu0 %v1077
    %1081 = vmatprep.subr.mxu0 0.0
    %1082 = vmatpush1.msra.mxu0 0.0
    %1083 = vmatprep.subr.mxu0 0.0
    %1084 = vmatpush1.msra.mxu0 0.0
    %1085 = vmatprep.subr.mxu0 0.0
    %1086 = vmatpush1.msra.mxu0 0.0
    %1087 = vmatprep.subr.mxu0 0.0
    %1088 = vmatpush1.msra.mxu0 0.0
    %1089 = vmatprep.subr.mxu0 0.0
    %1090 = vmatpush1.msra.mxu0 0.0
    %1091 = vmatprep.subr.mxu0 0.0
    %1092 = vmatpush1.msra.mxu0 0.0
    %1093 = vmatprep.subr.mxu0 0.0
    %1094 = vmatpush1.msra.mxu0 0.0
    %1095 = vmatprep.subr.mxu0 0.0
    %1096 = vmatpush1.msra.mxu0 0.0
    %1097 = vmatprep.subr.mxu0 0.0
    %1098 = vmatpush1.msra.mxu0 0.0
    %1099 = vmatprep.subr.mxu0 0.0
    %1100 = vmatpush1.msra.mxu0 0.0
    %1101 = vmatprep.subr.mxu0 0.0
    %1102 = vmatpush1.msra.mxu0 0.0
    %1103 = vmatprep.subr.mxu0 0.0
    %1104 = vmatpush1.msra.mxu0 0.0
    %1105 = vmatprep.subr.mxu0 0.0
    %1106 = vmatpush1.msra.mxu0 0.0
    %1107 = vmatprep.subr.mxu0 0.0
    %1108 = vmatpush1.msra.mxu0 0.0
    %1109 = vmatprep.subr.mxu0 0.0
    %1110 = vmatpush1.msra.mxu0 0.0
    %1111 = vmatprep.subr.mxu0 0.0
    %1112 = vmatpush1.msra.mxu0 0.0
    %1113 = vmatprep.subr.mxu0 0.0
    %1114 = vmatpush1.msra.mxu0 0.0
    %1115 = vmatprep.subr.mxu0 0.0
    %1116 = vmatpush1.msra.mxu0 0.0
    %1117 = vmatprep.subr.mxu0 0.0
    %1118 = vmatpush1.msra.mxu0 0.0
    %1119 = vmatprep.subr.mxu0 0.0
    %1120 = vmatpush1.msra.mxu0 0.0
    %1121 = vmatprep.subr.mxu0 0.0
    %1122 = vmatpush1.msra.mxu0 0.0
    %1123 = vmatprep.subr.mxu0 0.0
    %1124 = vmatpush1.msra.mxu0 0.0
    %1125 = vmatprep.subr.mxu0 0.0
    %1126 = vmatpush1.msra.mxu0 0.0
    %1127 = vmatprep.subr.mxu0 0.0
    %1128 = vmatpush1.msra.mxu0 0.0
    %1129 = vmatprep.subr.mxu0 0.0
    %1130 = vmatpush1.msra.mxu0 0.0
    %1131 = vmatprep.subr.mxu0 0.0
    %1132 = vmatpush1.msra.mxu0 0.0
    %1133 = vmatprep.subr.mxu0 0.0
    %1134 = vmatpush1.msra.mxu0 0.0
    %1135 = vmatprep.subr.mxu0 0.0
    %1136 = vmatpush1.msra.mxu0 0.0
    %1137 = vmatprep.subr.mxu0 0.0
    %1138 = vmatpush1.msra.mxu0 0.0
    %1139 = vmatprep.subr.mxu0 0.0
    %1140 = vmatpush1.msra.mxu0 0.0
    %1141 = vmatprep.subr.mxu0 0.0
    %1142 = vmatpush1.msra.mxu0 0.0
    %1143 = vmatprep.mubr.f32.mxu0 0.0
    %1144 = vmatmul.mubr.f32.gmra.mrb[0].mxu0 %v1074
    %v1145 = vpop.f32.mrb[0].mxu0
    %v1146 = vadd.f32 0.0, %v1145
    %v1147 = vpop.f32.mrb[0].mxu0
    %1148 = vdwg.mxu0
    %v1149 = vadd.f32 %v911, %v1146
    %1150 = vrot.lane.b32.xlu0 %v1051, 127
    %v1151 = vpop.permute.xlu0 %1150
    %1152 = vrot.lane.b32.xlu0 %v1054, 127
    %v1153 = vpop.permute.xlu0 %1152
    %v1156 = vsel %vm158, %v1151, 0.0
    %1157 = vadd.xlane.f32.xlu0 %v1156
    %v1158 = vpop.xlane.xlu0 %1157
    %v1159 = vsel %vm158, %v1153, 0.0
    %1160 = vadd.xlane.f32.xlu0 %v1159
    %v1161 = vpop.xlane.xlu0 %1160
    %v1164 = vlaneseq
    %v1165 = vshrl.u32 %v1164, 7
    %v1166 = vsub.s32 %v180, %v1165
    %v1167 = vrot.slane %v1158, %v1166
    %v1168 = vlaneseq
    %v1169 = vshrl.u32 %v1168, 7
    %v1170 = vsub.s32 %v180, %v1169
    %v1171 = vrot.slane %v1161, %v1170
    %v1172 = vsel %vm147, %v1171, %v1167
    %v1173 = vsel %vm190, %v1172, 0
    %v1176 = vsel %vm193, %v64, 0
    %1178 = vmatprep.subr.mxu0 0.0
    %1179 = vmatpush1.msra.mxu0 %v1176
    %1180 = vmatprep.subr.mxu0 0.0
    %1181 = vmatpush1.msra.mxu0 0.0
    %1182 = vmatprep.subr.mxu0 0.0
    %1183 = vmatpush1.msra.mxu0 0.0
    %1184 = vmatprep.subr.mxu0 0.0
    %1185 = vmatpush1.msra.mxu0 0.0
    %1186 = vmatprep.subr.mxu0 0.0
    %1187 = vmatpush1.msra.mxu0 0.0
    %1188 = vmatprep.subr.mxu0 0.0
    %1189 = vmatpush1.msra.mxu0 0.0
    %1190 = vmatprep.subr.mxu0 0.0
    %1191 = vmatpush1.msra.mxu0 0.0
    %1192 = vmatprep.subr.mxu0 0.0
    %1193 = vmatpush1.msra.mxu0 0.0
    %1194 = vmatprep.subr.mxu0 0.0
    %1195 = vmatpush1.msra.mxu0 0.0
    %1196 = vmatprep.subr.mxu0 0.0
    %1197 = vmatpush1.msra.mxu0 0.0
    %1198 = vmatprep.subr.mxu0 0.0
    %1199 = vmatpush1.msra.mxu0 0.0
    %1200 = vmatprep.subr.mxu0 0.0
    %1201 = vmatpush1.msra.mxu0 0.0
    %1202 = vmatprep.subr.mxu0 0.0
    %1203 = vmatpush1.msra.mxu0 0.0
    %1204 = vmatprep.subr.mxu0 0.0
    %1205 = vmatpush1.msra.mxu0 0.0
    %1206 = vmatprep.subr.mxu0 0.0
    %1207 = vmatpush1.msra.mxu0 0.0
    %1208 = vmatprep.subr.mxu0 0.0
    %1209 = vmatpush1.msra.mxu0 0.0
    %1210 = vmatprep.subr.mxu0 0.0
    %1211 = vmatpush1.msra.mxu0 0.0
    %1212 = vmatprep.subr.mxu0 0.0
    %1213 = vmatpush1.msra.mxu0 0.0
    %1214 = vmatprep.subr.mxu0 0.0
    %1215 = vmatpush1.msra.mxu0 0.0
    %1216 = vmatprep.subr.mxu0 0.0
    %1217 = vmatpush1.msra.mxu0 0.0
    %1218 = vmatprep.subr.mxu0 0.0
    %1219 = vmatpush1.msra.mxu0 0.0
    %1220 = vmatprep.subr.mxu0 0.0
    %1221 = vmatpush1.msra.mxu0 0.0
    %1222 = vmatprep.subr.mxu0 0.0
    %1223 = vmatpush1.msra.mxu0 0.0
    %1224 = vmatprep.subr.mxu0 0.0
    %1225 = vmatpush1.msra.mxu0 0.0
    %1226 = vmatprep.subr.mxu0 0.0
    %1227 = vmatpush1.msra.mxu0 0.0
    %1228 = vmatprep.subr.mxu0 0.0
    %1229 = vmatpush1.msra.mxu0 0.0
    %1230 = vmatprep.subr.mxu0 0.0
    %1231 = vmatpush1.msra.mxu0 0.0
    %1232 = vmatprep.subr.mxu0 0.0
    %1233 = vmatpush1.msra.mxu0 0.0
    %1234 = vmatprep.subr.mxu0 0.0
    %1235 = vmatpush1.msra.mxu0 0.0
    %1236 = vmatprep.subr.mxu0 0.0
    %1237 = vmatpush1.msra.mxu0 0.0
    %1238 = vmatprep.subr.mxu0 0.0
    %1239 = vmatpush1.msra.mxu0 0.0
    %1240 = vmatprep.subr.mxu0 0.0
    %1241 = vmatpush1.msra.mxu0 0.0
    %1242 = vmatprep.mubr.f32.mxu0 0.0
    %1243 = vmatmul.mubr.f32.gmra.mrb[0].mxu0 %v1173
    %v1244 = vpop.f32.mrb[0].mxu0
    %v1245 = vadd.f32 0.0, %v1244
    %v1246 = vpop.f32.mrb[0].mxu0
    %1247 = vdwg.mxu0
    %v1248 = vadd.f32 %v1149, %v1245
    %1249 = vrot.lane.b32.xlu0 %v1051, 126
    %v1250 = vpop.permute.xlu0 %1249
    %1251 = vrot.lane.b32.xlu0 %v1054, 126
    %v1252 = vpop.permute.xlu0 %1251
    %v1255 = vsel %vm158, %v1250, 0.0
    %1256 = vadd.xlane.f32.xlu0 %v1255
    %v1257 = vpop.xlane.xlu0 %1256
    %v1258 = vsel %vm158, %v1252, 0.0
    %1259 = vadd.xlane.f32.xlu0 %v1258
    %v1260 = vpop.xlane.xlu0 %1259
    %v1263 = vlaneseq
    %v1264 = vshrl.u32 %v1263, 7
    %v1265 = vsub.s32 %v180, %v1264
    %v1266 = vrot.slane %v1257, %v1265
    %v1267 = vlaneseq
    %v1268 = vshrl.u32 %v1267, 7
    %v1269 = vsub.s32 %v180, %v1268
    %v1270 = vrot.slane %v1260, %v1269
    %v1271 = vsel %vm147, %v1270, %v1266
    %v1272 = vsel %vm190, %v1271, 0
    %v1275 = vsel %vm193, %v65, 0
    %1277 = vmatprep.subr.mxu0 0.0
    %1278 = vmatpush1.msra.mxu0 %v1275
    %1279 = vmatprep.subr.mxu0 0.0
    %1280 = vmatpush1.msra.mxu0 0.0
    %1281 = vmatprep.subr.mxu0 0.0
    %1282 = vmatpush1.msra.mxu0 0.0
    %1283 = vmatprep.subr.mxu0 0.0
    %1284 = vmatpush1.msra.mxu0 0.0
    %1285 = vmatprep.subr.mxu0 0.0
    %1286 = vmatpush1.msra.mxu0 0.0
    %1287 = vmatprep.subr.mxu0 0.0
    %1288 = vmatpush1.msra.mxu0 0.0
    %1289 = vmatprep.subr.mxu0 0.0
    %1290 = vmatpush1.msra.mxu0 0.0
    %1291 = vmatprep.subr.mxu0 0.0
    %1292 = vmatpush1.msra.mxu0 0.0
    %1293 = vmatprep.subr.mxu0 0.0
    %1294 = vmatpush1.msra.mxu0 0.0
    %1295 = vmatprep.subr.mxu0 0.0
    %1296 = vmatpush1.msra.mxu0 0.0
    %1297 = vmatprep.subr.mxu0 0.0
    %1298 = vmatpush1.msra.mxu0 0.0
    %1299 = vmatprep.subr.mxu0 0.0
    %1300 = vmatpush1.msra.mxu0 0.0
    %1301 = vmatprep.subr.mxu0 0.0
    %1302 = vmatpush1.msra.mxu0 0.0
    %1303 = vmatprep.subr.mxu0 0.0
    %1304 = vmatpush1.msra.mxu0 0.0
    %1305 = vmatprep.subr.mxu0 0.0
    %1306 = vmatpush1.msra.mxu0 0.0
    %1307 = vmatprep.subr.mxu0 0.0
    %1308 = vmatpush1.msra.mxu0 0.0
    %1309 = vmatprep.subr.mxu0 0.0
    %1310 = vmatpush1.msra.mxu0 0.0
    %1311 = vmatprep.subr.mxu0 0.0
    %1312 = vmatpush1.msra.mxu0 0.0
    %1313 = vmatprep.subr.mxu0 0.0
    %1314 = vmatpush1.msra.mxu0 0.0
    %1315 = vmatprep.subr.mxu0 0.0
    %1316 = vmatpush1.msra.mxu0 0.0
    %1317 = vmatprep.subr.mxu0 0.0
    %1318 = vmatpush1.msra.mxu0 0.0
    %1319 = vmatprep.subr.mxu0 0.0
    %1320 = vmatpush1.msra.mxu0 0.0
    %1321 = vmatprep.subr.mxu0 0.0
    %1322 = vmatpush1.msra.mxu0 0.0
    %1323 = vmatprep.subr.mxu0 0.0
    %1324 = vmatpush1.msra.mxu0 0.0
    %1325 = vmatprep.subr.mxu0 0.0
    %1326 = vmatpush1.msra.mxu0 0.0
    %1327 = vmatprep.subr.mxu0 0.0
    %1328 = vmatpush1.msra.mxu0 0.0
    %1329 = vmatprep.subr.mxu0 0.0
    %1330 = vmatpush1.msra.mxu0 0.0
    %1331 = vmatprep.subr.mxu0 0.0
    %1332 = vmatpush1.msra.mxu0 0.0
    %1333 = vmatprep.subr.mxu0 0.0
    %1334 = vmatpush1.msra.mxu0 0.0
    %1335 = vmatprep.subr.mxu0 0.0
    %1336 = vmatpush1.msra.mxu0 0.0
    %1337 = vmatprep.subr.mxu0 0.0
    %1338 = vmatpush1.msra.mxu0 0.0
    %1339 = vmatprep.subr.mxu0 0.0
    %1340 = vmatpush1.msra.mxu0 0.0
    %1341 = vmatprep.mubr.f32.mxu0 0.0
    %1342 = vmatmul.mubr.f32.gmra.mrb[0].mxu0 %v1272
    %v1343 = vpop.f32.mrb[0].mxu0
    %v1344 = vadd.f32 0.0, %v1343
    %v1345 = vpop.f32.mrb[0].mxu0
    %1346 = vdwg.mxu0
    %v1347 = vadd.f32 %v1248, %v1344
    %v1348 = vmul.f32 %v1347, 0.00390625
    %v1349 = vld [vmem:[%s7] sm:$0x1]
    %v1350 = vlaneseq
    %v1351 = vshrl.u32 %v1350, 7
    %v1352 = vsub.s32 0, %v1351
    %v1353 = vrot.slane %v1349, %v1352
    %v1354 = vadd.f32 %v1348, %v1353
    %vm1355 = vcmask 254976
    %v1356 = vsel %vm1355, %v1354, 0.0
    %1357 = vadd.xlane.f32.xlu0 %v1356
    %v1358 = vpop.xlane.xlu0 %1357
    %v1359 = vrcp.pop 32.0
    %v1360 = vmul.f32 %v1358, %v1359
    %v1361 = vsub.f32 %v1354, %v1360
    %v1362 = vmul.f32 %v1361, %v1361
    %v1363 = vsel %vm1355, %v1362, 0.0
    %1364 = vadd.xlane.f32.xlu0 %v1363
    %v1365 = vpop.xlane.xlu0 %1364
    %v1366 = vmul.f32 %v1365, %v1359
    %v1367 = vadd.f32 %v1366, 1e-05
    %v1368 = vrsqrt.pop %v1367
    %v1369 = vmul.f32 %v1361, %v1368
    %v1370 = vld [vmem:[%s7 + $0x1] sm:$0x1]
    %v1371 = vlaneseq
    %v1372 = vshrl.u32 %v1371, 7
    %v1373 = vsub.s32 0, %v1372
    %v1374 = vrot.slane %v1370, %v1373
    %v1375 = vmul.f32 %v1369, %v1374
    %v1376 = vld [vmem:[%s7 + $0x2] sm:$0x1]
    %v1377 = vlaneseq
    %v1378 = vshrl.u32 %v1377, 7
    %v1379 = vsub.s32 0, %v1378
    %v1380 = vrot.slane %v1376, %v1379
    %v1381 = vadd.f32 %v1375, %v1380
    %v1382 = vld [vmem:[%s1] sm:$0x3]
    %v1383 = vld [vmem:[%s3] sm:$0xf]
    %v1384 = vld [vmem:[%s7 + $0x3] sm:$0x1]
    %v1385 = vlaneseq
    %v1386 = vshrl.u32 %v1385, 7
    %v1387 = vsub.s32 0, %v1386
    %v1388 = vrot.slane %v1384, %v1387
    %v1390 = vsel %vm190, %v1382, 0
    %v1393 = vsel %vm193, %v1383, 0
    %1395 = vmatprep.subr.mxu0 0.0
    %1396 = vmatpush1.msra.mxu0 %v1393
    %1397 = vmatprep.subr.mxu0 0.0
    %1398 = vmatpush1.msra.mxu0 0.0
    %1399 = vmatprep.subr.mxu0 0.0
    %1400 = vmatpush1.msra.mxu0 0.0
    %1401 = vmatprep.subr.mxu0 0.0
    %1402 = vmatpush1.msra.mxu0 0.0
    %1403 = vmatprep.subr.mxu0 0.0
    %1404 = vmatpush1.msra.mxu0 0.0
    %1405 = vmatprep.subr.mxu0 0.0
    %1406 = vmatpush1.msra.mxu0 0.0
    %1407 = vmatprep.subr.mxu0 0.0
    %1408 = vmatpush1.msra.mxu0 0.0
    %1409 = vmatprep.subr.mxu0 0.0
    %1410 = vmatpush1.msra.mxu0 0.0
    %1411 = vmatprep.subr.mxu0 0.0
    %1412 = vmatpush1.msra.mxu0 0.0
    %1413 = vmatprep.subr.mxu0 0.0
    %1414 = vmatpush1.msra.mxu0 0.0
    %1415 = vmatprep.subr.mxu0 0.0
    %1416 = vmatpush1.msra.mxu0 0.0
    %1417 = vmatprep.subr.mxu0 0.0
    %1418 = vmatpush1.msra.mxu0 0.0
    %1419 = vmatprep.subr.mxu0 0.0
    %1420 = vmatpush1.msra.mxu0 0.0
    %1421 = vmatprep.subr.mxu0 0.0
    %1422 = vmatpush1.msra.mxu0 0.0
    %1423 = vmatprep.subr.mxu0 0.0
    %1424 = vmatpush1.msra.mxu0 0.0
    %1425 = vmatprep.subr.mxu0 0.0
    %1426 = vmatpush1.msra.mxu0 0.0
    %1427 = vmatprep.subr.mxu0 0.0
    %1428 = vmatpush1.msra.mxu0 0.0
    %1429 = vmatprep.subr.mxu0 0.0
    %1430 = vmatpush1.msra.mxu0 0.0
    %1431 = vmatprep.subr.mxu0 0.0
    %1432 = vmatpush1.msra.mxu0 0.0
    %1433 = vmatprep.subr.mxu0 0.0
    %1434 = vmatpush1.msra.mxu0 0.0
    %1435 = vmatprep.subr.mxu0 0.0
    %1436 = vmatpush1.msra.mxu0 0.0
    %1437 = vmatprep.subr.mxu0 0.0
    %1438 = vmatpush1.msra.mxu0 0.0
    %1439 = vmatprep.subr.mxu0 0.0
    %1440 = vmatpush1.msra.mxu0 0.0
    %1441 = vmatprep.subr.mxu0 0.0
    %1442 = vmatpush1.msra.mxu0 0.0
    %1443 = vmatprep.subr.mxu0 0.0
    %1444 = vmatpush1.msra.mxu0 0.0
    %1445 = vmatprep.subr.mxu0 0.0
    %1446 = vmatpush1.msra.mxu0 0.0
    %1447 = vmatprep.subr.mxu0 0.0
    %1448 = vmatpush1.msra.mxu0 0.0
    %1449 = vmatprep.subr.mxu0 0.0
    %1450 = vmatpush1.msra.mxu0 0.0
    %1451 = vmatprep.subr.mxu0 0.0
    %1452 = vmatpush1.msra.mxu0 0.0
    %1453 = vmatprep.subr.mxu0 0.0
    %1454 = vmatpush1.msra.mxu0 0.0
    %1455 = vmatprep.subr.mxu0 0.0
    %1456 = vmatpush1.msra.mxu0 0.0
    %1457 = vmatprep.subr.mxu0 0.0
    %1458 = vmatpush1.msra.mxu0 0.0
    %1459 = vmatprep.mubr.f32.mxu0 0.0
    %1460 = vmatmul.mubr.f32.gmra.mrb[0].mxu0 %v1390
    %v1461 = vpop.f32.mrb[0].mxu0
    %v1462 = vadd.f32 %v1388, %v1461
    %v1463 = vpop.f32.mrb[0].mxu0
    %1464 = vdwg.mxu0
    %v1465 = vxor.u32 %v1462, 2147483648
    %v1466 = vmul.f32 %v1465, 1.442695
    %v1467 = vpow.pop %v1466
    %v1468 = vadd.f32 %v1467, 1.0
    %v1469 = vrcp.pop %v1468
    %v1470 = vmul.f32 1.0, %v1469
    %v1471 = vmul.f32 %v1462, %v1470
    %v1472 = vld [vmem:[%s4] sm:$0xff]
    %v1473 = vld [vmem:[%s4 + $0x8] sm:$0xff]
    %v1474 = vld [vmem:[%s7 + $0x4] sm:$0x1]
    %v1475 = vlaneseq
    %v1476 = vshrl.u32 %v1475, 7
    %v1477 = vsub.s32 0, %v1476
    %v1478 = vrot.slane %v1474, %v1477
    %vm1479 = vcmask 130048
    %v1481 = vsel %vm1479, %v1471, 0
    %1483 = vmatprep.subr.mxu0 0.0
    %1484 = vmatpush1.msra.mxu0 %v1472
    %1485 = vmatprep.subr.mxu0 0.0
    %1486 = vmatpush1.msra.mxu0 %v1473
    %1487 = vmatprep.subr.mxu0 0.0
    %1488 = vmatpush1.msra.mxu0 0.0
    %1489 = vmatprep.subr.mxu0 0.0
    %1490 = vmatpush1.msra.mxu0 0.0
    %1491 = vmatprep.subr.mxu0 0.0
    %1492 = vmatpush1.msra.mxu0 0.0
    %1493 = vmatprep.subr.mxu0 0.0
    %1494 = vmatpush1.msra.mxu0 0.0
    %1495 = vmatprep.subr.mxu0 0.0
    %1496 = vmatpush1.msra.mxu0 0.0
    %1497 = vmatprep.subr.mxu0 0.0
    %1498 = vmatpush1.msra.mxu0 0.0
    %1499 = vmatprep.subr.mxu0 0.0
    %1500 = vmatpush1.msra.mxu0 0.0
    %1501 = vmatprep.subr.mxu0 0.0
    %1502 = vmatpush1.msra.mxu0 0.0
    %1503 = vmatprep.subr.mxu0 0.0
    %1504 = vmatpush1.msra.mxu0 0.0
    %1505 = vmatprep.subr.mxu0 0.0
    %1506 = vmatpush1.msra.mxu0 0.0
    %1507 = vmatprep.subr.mxu0 0.0
    %1508 = vmatpush1.msra.mxu0 0.0
    %1509 = vmatprep.subr.mxu0 0.0
    %1510 = vmatpush1.msra.mxu0 0.0
    %1511 = vmatprep.subr.mxu0 0.0
    %1512 = vmatpush1.msra.mxu0 0.0
    %1513 = vmatprep.subr.mxu0 0.0
    %1514 = vmatpush1.msra.mxu0 0.0
    %1515 = vmatprep.subr.mxu0 0.0
    %1516 = vmatpush1.msra.mxu0 0.0
    %1517 = vmatprep.subr.mxu0 0.0
    %1518 = vmatpush1.msra.mxu0 0.0
    %1519 = vmatprep.subr.mxu0 0.0
    %1520 = vmatpush1.msra.mxu0 0.0
    %1521 = vmatprep.subr.mxu0 0.0
    %1522 = vmatpush1.msra.mxu0 0.0
    %1523 = vmatprep.subr.mxu0 0.0
    %1524 = vmatpush1.msra.mxu0 0.0
    %1525 = vmatprep.subr.mxu0 0.0
    %1526 = vmatpush1.msra.mxu0 0.0
    %1527 = vmatprep.subr.mxu0 0.0
    %1528 = vmatpush1.msra.mxu0 0.0
    %1529 = vmatprep.subr.mxu0 0.0
    %1530 = vmatpush1.msra.mxu0 0.0
    %1531 = vmatprep.subr.mxu0 0.0
    %1532 = vmatpush1.msra.mxu0 0.0
    %1533 = vmatprep.subr.mxu0 0.0
    %1534 = vmatpush1.msra.mxu0 0.0
    %1535 = vmatprep.subr.mxu0 0.0
    %1536 = vmatpush1.msra.mxu0 0.0
    %1537 = vmatprep.subr.mxu0 0.0
    %1538 = vmatpush1.msra.mxu0 0.0
    %1539 = vmatprep.subr.mxu0 0.0
    %1540 = vmatpush1.msra.mxu0 0.0
    %1541 = vmatprep.subr.mxu0 0.0
    %1542 = vmatpush1.msra.mxu0 0.0
    %1543 = vmatprep.subr.mxu0 0.0
    %1544 = vmatpush1.msra.mxu0 0.0
    %1545 = vmatprep.subr.mxu0 0.0
    %1546 = vmatpush1.msra.mxu0 0.0
    %1547 = vmatprep.mubr.f32.mxu0 0.0
    %1548 = vmatmul.mubr.f32.gmra.mrb[0].mxu0 %v1481
    %v1549 = vpop.f32.mrb[0].mxu0
    %v1550 = vadd.f32 %v1478, %v1549
    %v1551 = vpop.f32.mrb[0].mxu0
    %1552 = vdwg.mxu0
    %v1553 = vxor.u32 %v1550, 2147483648
    %v1554 = vmul.f32 %v1553, 1.442695
    %v1555 = vpow.pop %v1554
    %v1556 = vadd.f32 %v1555, 1.0
    %v1557 = vrcp.pop %v1556
    %v1558 = vmul.f32 1.0, %v1557
    %v1559 = vmul.f32 %v1550, %v1558
    %v1560 = vld [vmem:[%s5] sm:$0xff]
    %v1561 = vld [vmem:[%s5 + $0x8] sm:$0xff]
    %v1562 = vld [vmem:[%s5 + $0x10] sm:$0xff]
    %v1563 = vld [vmem:[%s5 + $0x18] sm:$0xff]
    %s1564 = scalar_lea.vmem %s5, 32
    %v1565 = vld [vmem:[%s1564] sm:$0xff]
    %v1566 = vld [vmem:[%s1564 + $0x8] sm:$0xff]
    %v1567 = vld [vmem:[%s1564 + $0x10] sm:$0xff]
    %v1568 = vld [vmem:[%s1564 + $0x18] sm:$0xff]
    %vm1569 = vcmask 261120
    %v1571 = vsel %vm1569, %v1559, 0
    %1573 = vmatprep.subr.mxu0 0.0
    %1574 = vmatpush1.msra.mxu0 %v1565
    %1575 = vmatprep.subr.mxu0 0.0
    %1576 = vmatpush1.msra.mxu0 %v1566
    %1577 = vmatprep.subr.mxu0 0.0
    %1578 = vmatpush1.msra.mxu0 %v1567
    %1579 = vmatprep.subr.mxu0 0.0
    %1580 = vmatpush1.msra.mxu0 %v1568
    %1581 = vmatprep.subr.mxu0 0.0
    %1582 = vmatpush1.msra.mxu0 0.0
    %1583 = vmatprep.subr.mxu0 0.0
    %1584 = vmatpush1.msra.mxu0 0.0
    %1585 = vmatprep.subr.mxu0 0.0
    %1586 = vmatpush1.msra.mxu0 0.0
    %1587 = vmatprep.subr.mxu0 0.0
    %1588 = vmatpush1.msra.mxu0 0.0
    %1589 = vmatprep.subr.mxu0 0.0
    %1590 = vmatpush1.msra.mxu0 0.0
    %1591 = vmatprep.subr.mxu0 0.0
    %1592 = vmatpush1.msra.mxu0 0.0
    %1593 = vmatprep.subr.mxu0 0.0
    %1594 = vmatpush1.msra.mxu0 0.0
    %1595 = vmatprep.subr.mxu0 0.0
    %1596 = vmatpush1.msra.mxu0 0.0
    %1597 = vmatprep.subr.mxu0 0.0
    %1598 = vmatpush1.msra.mxu0 0.0
    %1599 = vmatprep.subr.mxu0 0.0
    %1600 = vmatpush1.msra.mxu0 0.0
    %1601 = vmatprep.subr.mxu0 0.0
    %1602 = vmatpush1.msra.mxu0 0.0
    %1603 = vmatprep.subr.mxu0 0.0
    %1604 = vmatpush1.msra.mxu0 0.0
    %1605 = vmatprep.subr.mxu0 0.0
    %1606 = vmatpush1.msra.mxu0 0.0
    %1607 = vmatprep.subr.mxu0 0.0
    %1608 = vmatpush1.msra.mxu0 0.0
    %1609 = vmatprep.subr.mxu0 0.0
    %1610 = vmatpush1.msra.mxu0 0.0
    %1611 = vmatprep.subr.mxu0 0.0
    %1612 = vmatpush1.msra.mxu0 0.0
    %1613 = vmatprep.subr.mxu0 0.0
    %1614 = vmatpush1.msra.mxu0 0.0
    %1615 = vmatprep.subr.mxu0 0.0
    %1616 = vmatpush1.msra.mxu0 0.0
    %1617 = vmatprep.subr.mxu0 0.0
    %1618 = vmatpush1.msra.mxu0 0.0
    %1619 = vmatprep.subr.mxu0 0.0
    %1620 = vmatpush1.msra.mxu0 0.0
    %1621 = vmatprep.subr.mxu0 0.0
    %1622 = vmatpush1.msra.mxu0 0.0
    %1623 = vmatprep.subr.mxu0 0.0
    %1624 = vmatpush1.msra.mxu0 0.0
    %1625 = vmatprep.subr.mxu0 0.0
    %1626 = vmatpush1.msra.mxu0 0.0
    %1627 = vmatprep.subr.mxu0 0.0
    %1628 = vmatpush1.msra.mxu0 0.0
    %1629 = vmatprep.subr.mxu0 0.0
    %1630 = vmatpush1.msra.mxu0 0.0
    %1631 = vmatprep.subr.mxu0 0.0
    %1632 = vmatpush1.msra.mxu0 0.0
    %1633 = vmatprep.subr.mxu0 0.0
    %1634 = vmatpush1.msra.mxu0 0.0
    %1635 = vmatprep.subr.mxu0 0.0
    %1636 = vmatpush1.msra.mxu0 0.0
    %1637 = vmatprep.mubr.f32.mxu0 0.0
    %1638 = vmatmul.mubr.f32.gmra.mrb[0].mxu0 %v1571
    %v1639 = vpop.f32.mrb[0].mxu0
    %v1640 = vadd.f32 0.0, %v1639
    %v1641 = vpop.f32.mrb[0].mxu0
    %1642 = vdwg.mxu0
    %v1644 = vsel %vm1569, %v1381, 0
    %1646 = vmatprep.subr.mxu0 0.0
    %1647 = vmatpush1.msra.mxu0 %v1560
    %1648 = vmatprep.subr.mxu0 0.0
    %1649 = vmatpush1.msra.mxu0 %v1561
    %1650 = vmatprep.subr.mxu0 0.0
    %1651 = vmatpush1.msra.mxu0 %v1562
    %1652 = vmatprep.subr.mxu0 0.0
    %1653 = vmatpush1.msra.mxu0 %v1563
    %1654 = vmatprep.subr.mxu0 0.0
    %1655 = vmatpush1.msra.mxu0 0.0
    %1656 = vmatprep.subr.mxu0 0.0
    %1657 = vmatpush1.msra.mxu0 0.0
    %1658 = vmatprep.subr.mxu0 0.0
    %1659 = vmatpush1.msra.mxu0 0.0
    %1660 = vmatprep.subr.mxu0 0.0
    %1661 = vmatpush1.msra.mxu0 0.0
    %1662 = vmatprep.subr.mxu0 0.0
    %1663 = vmatpush1.msra.mxu0 0.0
    %1664 = vmatprep.subr.mxu0 0.0
    %1665 = vmatpush1.msra.mxu0 0.0
    %1666 = vmatprep.subr.mxu0 0.0
    %1667 = vmatpush1.msra.mxu0 0.0
    %1668 = vmatprep.subr.mxu0 0.0
    %1669 = vmatpush1.msra.mxu0 0.0
    %1670 = vmatprep.subr.mxu0 0.0
    %1671 = vmatpush1.msra.mxu0 0.0
    %1672 = vmatprep.subr.mxu0 0.0
    %1673 = vmatpush1.msra.mxu0 0.0
    %1674 = vmatprep.subr.mxu0 0.0
    %1675 = vmatpush1.msra.mxu0 0.0
    %1676 = vmatprep.subr.mxu0 0.0
    %1677 = vmatpush1.msra.mxu0 0.0
    %1678 = vmatprep.subr.mxu0 0.0
    %1679 = vmatpush1.msra.mxu0 0.0
    %1680 = vmatprep.subr.mxu0 0.0
    %1681 = vmatpush1.msra.mxu0 0.0
    %1682 = vmatprep.subr.mxu0 0.0
    %1683 = vmatpush1.msra.mxu0 0.0
    %1684 = vmatprep.subr.mxu0 0.0
    %1685 = vmatpush1.msra.mxu0 0.0
    %1686 = vmatprep.subr.mxu0 0.0
    %1687 = vmatpush1.msra.mxu0 0.0
    %1688 = vmatprep.subr.mxu0 0.0
    %1689 = vmatpush1.msra.mxu0 0.0
    %1690 = vmatprep.subr.mxu0 0.0
    %1691 = vmatpush1.msra.mxu0 0.0
    %1692 = vmatprep.subr.mxu0 0.0
    %1693 = vmatpush1.msra.mxu0 0.0
    %1694 = vmatprep.subr.mxu0 0.0
    %1695 = vmatpush1.msra.mxu0 0.0
    %1696 = vmatprep.subr.mxu0 0.0
    %1697 = vmatpush1.msra.mxu0 0.0
    %1698 = vmatprep.subr.mxu0 0.0
    %1699 = vmatpush1.msra.mxu0 0.0
    %1700 = vmatprep.subr.mxu0 0.0
    %1701 = vmatpush1.msra.mxu0 0.0
    %1702 = vmatprep.subr.mxu0 0.0
    %1703 = vmatpush1.msra.mxu0 0.0
    %1704 = vmatprep.subr.mxu0 0.0
    %1705 = vmatpush1.msra.mxu0 0.0
    %1706 = vmatprep.subr.mxu0 0.0
    %1707 = vmatpush1.msra.mxu0 0.0
    %1708 = vmatprep.subr.mxu0 0.0
    %1709 = vmatpush1.msra.mxu0 0.0
    %1710 = vmatprep.mubr.f32.mxu0 0.0
    %1711 = vmatmul.mubr.f32.gmra.mrb[0].mxu0 %v1644
    %v1712 = vpop.f32.mrb[0].mxu0
    %v1713 = vadd.f32 %v1640, %v1712
    %v1714 = vpop.f32.mrb[0].mxu0
    %1715 = vdwg.mxu0
    %v1716 = vld [vmem:[%s7 + $0x5] sm:$0x1]
    %v1717 = vlaneseq
    %v1718 = vshrl.u32 %v1717, 7
    %v1719 = vsub.s32 0, %v1718
    %v1720 = vrot.slane %v1716, %v1719
    %v1721 = vadd.f32 %v1713, %v1720
    %v1722 = vxor.u32 %v1721, 2147483648
    %v1723 = vmul.f32 %v1722, 1.442695
    %v1724 = vpow.pop %v1723
    %v1725 = vadd.f32 %v1724, 1.0
    %v1726 = vrcp.pop %v1725
    %v1727 = vmul.f32 1.0, %v1726
    %v1728 = vmul.f32 %v1381, %v1727
    %v1729 = vld [vmem:[%s6] sm:$0xff]
    %v1730 = vld [vmem:[%s6 + $0x8] sm:$0xff]
    %v1731 = vld [vmem:[%s6 + $0x10] sm:$0xff]
    %v1732 = vld [vmem:[%s6 + $0x18] sm:$0xff]
    %v1733 = vld [vmem:[%s7 + $0x6] sm:$0x1]
    %v1734 = vlaneseq
    %v1735 = vshrl.u32 %v1734, 7
    %v1736 = vsub.s32 0, %v1735
    %v1737 = vrot.slane %v1733, %v1736
    %v1739 = vsel %vm1569, %v1728, 0
    %1741 = vmatprep.subr.mxu0 0.0
    %1742 = vmatpush1.msra.mxu0 %v1729
    %1743 = vmatprep.subr.mxu0 0.0
    %1744 = vmatpush1.msra.mxu0 %v1730
    %1745 = vmatprep.subr.mxu0 0.0
    %1746 = vmatpush1.msra.mxu0 %v1731
    %1747 = vmatprep.subr.mxu0 0.0
    %1748 = vmatpush1.msra.mxu0 %v1732
    %1749 = vmatprep.subr.mxu0 0.0
    %1750 = vmatpush1.msra.mxu0 0.0
    %1751 = vmatprep.subr.mxu0 0.0
    %1752 = vmatpush1.msra.mxu0 0.0
    %1753 = vmatprep.subr.mxu0 0.0
    %1754 = vmatpush1.msra.mxu0 0.0
    %1755 = vmatprep.subr.mxu0 0.0
    %1756 = vmatpush1.msra.mxu0 0.0
    %1757 = vmatprep.subr.mxu0 0.0
    %1758 = vmatpush1.msra.mxu0 0.0
    %1759 = vmatprep.subr.mxu0 0.0
    %1760 = vmatpush1.msra.mxu0 0.0
    %1761 = vmatprep.subr.mxu0 0.0
    %1762 = vmatpush1.msra.mxu0 0.0
    %1763 = vmatprep.subr.mxu0 0.0
    %1764 = vmatpush1.msra.mxu0 0.0
    %1765 = vmatprep.subr.mxu0 0.0
    %1766 = vmatpush1.msra.mxu0 0.0
    %1767 = vmatprep.subr.mxu0 0.0
    %1768 = vmatpush1.msra.mxu0 0.0
    %1769 = vmatprep.subr.mxu0 0.0
    %1770 = vmatpush1.msra.mxu0 0.0
    %1771 = vmatprep.subr.mxu0 0.0
    %1772 = vmatpush1.msra.mxu0 0.0
    %1773 = vmatprep.subr.mxu0 0.0
    %1774 = vmatpush1.msra.mxu0 0.0
    %1775 = vmatprep.subr.mxu0 0.0
    %1776 = vmatpush1.msra.mxu0 0.0
    %1777 = vmatprep.subr.mxu0 0.0
    %1778 = vmatpush1.msra.mxu0 0.0
    %1779 = vmatprep.subr.mxu0 0.0
    %1780 = vmatpush1.msra.mxu0 0.0
    %1781 = vmatprep.subr.mxu0 0.0
    %1782 = vmatpush1.msra.mxu0 0.0
    %1783 = vmatprep.subr.mxu0 0.0
    %1784 = vmatpush1.msra.mxu0 0.0
    %1785 = vmatprep.subr.mxu0 0.0
    %1786 = vmatpush1.msra.mxu0 0.0
    %1787 = vmatprep.subr.mxu0 0.0
    %1788 = vmatpush1.msra.mxu0 0.0
    %1789 = vmatprep.subr.mxu0 0.0
    %1790 = vmatpush1.msra.mxu0 0.0
    %1791 = vmatprep.subr.mxu0 0.0
    %1792 = vmatpush1.msra.mxu0 0.0
    %1793 = vmatprep.subr.mxu0 0.0
    %1794 = vmatpush1.msra.mxu0 0.0
    %1795 = vmatprep.subr.mxu0 0.0
    %1796 = vmatpush1.msra.mxu0 0.0
    %1797 = vmatprep.subr.mxu0 0.0
    %1798 = vmatpush1.msra.mxu0 0.0
    %1799 = vmatprep.subr.mxu0 0.0
    %1800 = vmatpush1.msra.mxu0 0.0
    %1801 = vmatprep.subr.mxu0 0.0
    %1802 = vmatpush1.msra.mxu0 0.0
    %1803 = vmatprep.subr.mxu0 0.0
    %1804 = vmatpush1.msra.mxu0 0.0
    %1805 = vmatprep.mubr.f32.mxu0 0.0
    %1806 = vmatmul.mubr.f32.gmra.mrb[0].mxu0 %v1739
    %v1807 = vpop.f32.mrb[0].mxu0
    %v1808 = vadd.f32 %v1737, %v1807
    %v1809 = vpop.f32.mrb[0].mxu0
    %1810 = vdwg.mxu0
    %vm1811 = vcmask 33792
    %1812 = vst.msk [vmem:[#allocation2] sm:$0x3] %vm1811, %v1808
    %1814 = vrot.lane.b32.xlu0 %v1808, 123
    %v1815 = vpop.permute.xlu0 %1814
    %vm1817 = vcmask 41984
    %1818 = vst.msk [vmem:[#allocation4] sm:$0x3] %vm1817, %v1815
    // Predicated region
    $region34: #{model_forward.1} parent=1 // pred_check
      _
    $region35: #{model_forward.1} parent=1 // pred_check_branch
      %1820 = sbr.rel (0) target = $region37
    $region36: #{model_forward.1} parent=1 // pred_region
      %s1822 = ssub.s32 32, 32
      %1823 = vsyncadd [#allocation3], %s1822
      %s1825 = sshll.u32 [#allocation2], 4
      %s1826 = int_to_ptr.vmem [resolvable:$true] %s1825
      %1828 = dma.vmem_to_hbm [thread:$0]  %s1826, 32, %s8, [#allocation3]
    $region37: #{model_forward.1} parent=1 // pred_fallthru
      _
    // Predicated region
    $region38: #{model_forward.1} parent=1 // pred_check
      _
    $region39: #{model_forward.1} parent=1 // pred_check_branch
      %1830 = sbr.rel (0) target = $region41
    $region40: #{model_forward.1} parent=1 // pred_region
      %s1832 = ssub.s32 32, 32
      %1833 = vsyncadd [#allocation5], %s1832
      %s1835 = sshll.u32 [#allocation4], 4
      %s1836 = int_to_ptr.vmem [resolvable:$true] %s1835
      %1838 = dma.vmem_to_hbm [thread:$0]  %s1836, 32, %s9, [#allocation5]
    $region41: #{model_forward.1} parent=1 // pred_fallthru
      _
    // Predicated region
    $region42: #{model_forward.1} parent=1 // pred_check
      _
    $region43: #{model_forward.1} parent=1 // pred_check_branch
      %1840 = sbr.rel (0) target = $region45
    $region44: #{model_forward.1} parent=1 // pred_region
      %1841 = dma.done [#allocation3], 32
    $region45: #{model_forward.1} parent=1 // pred_fallthru
      _
    // Predicated region
    $region46: #{model_forward.1} parent=1 // pred_check
      _
    $region47: #{model_forward.1} parent=1 // pred_check_branch
      %1843 = sbr.rel (0) target = $region49
    $region48: #{model_forward.1} parent=1 // pred_region
      %1844 = dma.done [#allocation5], 32
    $region49: #{model_forward.1} parent=1 // pred_fallthru
      _
    %1845 = vsyncpa [#allocation3], 1
    %1846 = vsyncpa [#allocation5], 1

</llo_original>
